<compile_context>
chip_gen: v5e
topology: v5e:2x2
jax: 0.10.0
libtpu: 0.0.40
codegen_flags: <defaults>
</compile_context>

<pallas_src>
import numpy as np
import jax
import jax.numpy as jnp
from jax.experimental import pallas as pl
from jax.experimental.pallas import tpu as pltpu


def _round_up(x, m):
    return (x + m - 1) // m * m


# ----------------------------------------------------------------------------
# Pallas kernel: fused relu(fc1)->relu(fc2)->relu(fc3+eps)->relu(fc4) chain,
# gridded over (batch tiles, fc3-out / fc4-K tiles).
# ----------------------------------------------------------------------------
def _occlusion_kernel(x_ref, eps_ref,
                      w1_ref, b1_ref,
                      w2_ref, b2_ref,
                      w3_ref,            # fused [W3^T ; W3e^T ; b3+b3e row], bf16
                      w4_ref, b4_ref,    # f32
                      out_ref,
                      cat_scr):
    k = pl.program_id(1)
    nk = pl.num_programs(1)

    @pl.when(k == 0)
    def _init():
        # fc1 / fc2 are tiny: compute once per batch tile (f32, exact).
        h1 = jnp.maximum(
            jnp.dot(x_ref[...], w1_ref[...],
                    preferred_element_type=jnp.float32) + b1_ref[...], 0.0)
        h2 = jnp.maximum(
            jnp.dot(h1, w2_ref[...],
                    preferred_element_type=jnp.float32) + b2_ref[...], 0.0)
        # eps_ref is pre-placed at lane offset n2 with a constant-1 bias lane and
        # zeros elsewhere; W2^T columns are zero-padded, so a single full-width
        # unmasked add/store builds the fused fc3 input [h2 | eps | 1 | 0...].
        cat_scr[...] = eps_ref[...] + h2.astype(jnp.bfloat16)
        out_ref[...] = jnp.zeros_like(out_ref)

    # Fused fc3 tile (bias folded via the constant-1 lane): bf16 x bf16 MXU,
    # f32 accumulation.
    h3 = jnp.maximum(
        jnp.dot(cat_scr[...], w3_ref[...],
                preferred_element_type=jnp.float32), 0.0)

    # fc4 partial contribution of this K tile, accumulated directly in the
    # resident f32 output block.
    out_ref[...] += jnp.dot(h3, w4_ref[...], preferred_element_type=jnp.float32)

    @pl.when(k == nk - 1)
    def _finish():
        out_ref[...] = jnp.maximum(out_ref[...] + b4_ref[...], 0.0)


def occlusion_forward(x, eps, params, meta, *, block_b=1024, block_k=256):
    """Batched forward.  x: (B, 4), eps: (B, H+W).  Returns (B, n_out) f32."""
    (w1t, b1r, w2t, b2r, w3cat, w4t, b4r) = params
    B, n_x = x.shape
    n2, n_eps = meta["n2"], meta["n_eps"]
    n_cat, n_cat_p = meta["n_cat"], meta["n_cat_p"]
    k3p, n_out = meta["k3p"], meta["n_out"]
    n1 = meta["n1"]
    assert k3p % block_k == 0, "pack_kernel_params k_tile must match block_k"

    # One batch tile if it fits: the w3/w4 weight stream is then DMA'd once.
    tb = _round_up(min(block_b, _round_up(B, 8)), 8)
    bp = _round_up(B, tb)

    xp = jnp.zeros((bp, n_x), jnp.float32).at[:B].set(x.astype(jnp.float32))
    # eps pre-placed at lane offset n2; constant-1 bias lane at n_cat; rest 0.
    eps_pad = jnp.zeros((bp, n_cat_p), jnp.bfloat16)
    eps_pad = eps_pad.at[:B, n2:n2 + n_eps].set(eps.astype(jnp.bfloat16))
    eps_pad = eps_pad.at[:, n_cat].set(1.0)

    grid = (bp // tb, k3p // block_k)

    grid_spec = pltpu.PrefetchScalarGridSpec(
        num_scalar_prefetch=0,
        grid=grid,
        in_specs=[
            pl.BlockSpec((tb, n_x), lambda b, k: (b, 0)),            # x
            pl.BlockSpec((tb, n_cat_p), lambda b, k: (b, 0)),        # eps (+1 lane)
            pl.BlockSpec((n_x, n1), lambda b, k: (0, 0)),            # W1^T  f32
            pl.BlockSpec((1, n1), lambda b, k: (0, 0)),              # b1
            pl.BlockSpec((n1, n_cat_p), lambda b, k: (0, 0)),        # W2^T  f32 (padded cols)
            pl.BlockSpec((1, n_cat_p), lambda b, k: (0, 0)),         # b2 (padded)
            pl.BlockSpec((n_cat_p, block_k), lambda b, k: (0, k)),   # fused W3^T bf16 (+bias row)
            pl.BlockSpec((block_k, n_out), lambda b, k: (k, 0)),     # W4^T  f32 (un-padded N)
            pl.BlockSpec((1, n_out), lambda b, k: (0, 0)),           # b4
        ],
        out_specs=pl.BlockSpec((tb, n_out), lambda b, k: (b, 0)),
        scratch_shapes=[
            pltpu.VMEM((tb, n_cat_p), jnp.bfloat16),   # fused fc3 input [h2|eps|1]
        ],
    )

    out = pl.pallas_call(
        _occlusion_kernel,
        out_shape=jax.ShapeDtypeStruct((bp, n_out), jnp.float32),
        grid_spec=grid_spec,
        compiler_params=pltpu.CompilerParams(
            dimension_semantics=("parallel", "arbitrary"),
            vmem_limit_bytes=32 * 1024 * 1024,   # explicit (v5e default is 16 MiB)
        ),
    )(xp, eps_pad, w1t, b1r, w2t, b2r, w3cat, w4t, b4r)

    return out[:B]


# ----------------------------------------------------------------------------
# Deterministic parameter construction (mirrors the PyTorch __init__ code).
# ----------------------------------------------------------------------------
def first_layer_params(size_in, size_out):
    weights = np.zeros((size_out, size_in), np.float32)
    bias = np.zeros((size_out,), np.float32)
    block_size = size_out // 4
    for i in range(4):
        if i == 0 or i == 2:
            for j in range(block_size):
                weights[i * block_size + j, i] = 1
                bias[i * block_size + j] = -(j + 1)
        else:  # i == 1 or i == 3
            for j in range(block_size):
                weights[i * block_size + j, i - 1] = -1
                weights[i * block_size + j, i] = -1
                bias[i * block_size + j] = j + 2
    return weights, bias


def second_layer_params(size_in, size_out):
    weights = np.zeros((size_out, size_in), np.float32)
    block_size = size_out // 2
    for i in range(2):
        for j in range(block_size):
            weights[i * block_size + j, 2 * i * block_size + j] = -1
            weights[i * block_size + j, 2 * i * block_size + block_size + j] = -1
    bias = np.ones((size_out,), np.float32)
    return weights, bias


def third_layer_params(size_in, size_out, image_shape):
    _, image_height, image_width = image_shape
    weights = np.zeros((size_out, size_in), np.float32)
    input_block_size = size_in // 2
    for i in range(size_out):
        r, c = i // 2 // image_width, i // 2 % image_width
        weights[i, r] = 1
        weights[i, input_block_size + c] = 1
    bias = -np.ones((size_out,), np.float32) * 2

    size_in_eps = image_height + image_width
    weights_eps = np.zeros((size_out, size_in_eps), np.float32)
    eps_block = size_in_eps // 2
    for i in range(size_out):
        r, c = i // 2 // image_width, i // 2 % image_width
        s = 1.0 if i % 2 == 0 else -1.0
        weights_eps[i, r] = s
        weights_eps[i, eps_block + c] = s
    bias_eps = np.zeros((size_out,), np.float32)
    return weights, bias, weights_eps, bias_eps


def fourth_layer_params(size_in, size_out, image, fl_weight, fl_bias, shrink=True):
    image_channel, image_height, image_width = image.shape
    image_flatten = image.reshape(-1)
    weights = np.zeros((size_out, size_in), np.float32)
    for channel in range(image_channel):
        for i in range(size_out // image_channel):
            weights[channel * image_height * image_width + i, i * 2] = 1
            weights[channel * image_height * image_width + i, i * 2 + 1] = -1
    bias = np.ones((size_out,), np.float32) * image_flatten
    if shrink:
        weights = fl_weight @ weights
        bias = fl_bias + fl_weight @ bias
    return weights, bias


def build_dense_params(image, fl_weight, fl_bias, shrink=True):
    C, H, W = image.shape
    w1, b1 = first_layer_params(4, H * 2 + W * 2)
    w2, b2 = second_layer_params(w1.shape[0], w1.shape[0] // 2)
    w3, b3, w3e, b3e = third_layer_params(w2.shape[0], W * H * 2, image.shape)
    w4, b4 = fourth_layer_params(w3.shape[0], C * H * W, image,
                                 fl_weight, fl_bias, shrink=shrink)
    return (w1, b1, w2, b2, w3, b3, w3e, b3e, w4, b4)


def pack_kernel_params(dense, *, k_tile=256, cat_align=128):
    """Transpose to (in,out), fuse fc3 with its eps branch, fold b3+b3e into a
    constant-1 bias lane, pad the fused input width to a lane-dense multiple of
    128, pad the fc3-out / fc4-K dim to k_tile, and store the structured 0/+-1
    fc3 weights as bf16 (exact).  fc1/fc2 stay f32 (tiny, exact); the fc4
    weight/bias (folded with the real-valued model layer) stay f32 and its
    output dim is NOT padded."""
    (w1, b1, w2, b2, w3, b3, w3e, b3e, w4, b4) = dense
    n_x = w1.shape[1]
    n1 = w1.shape[0]
    n2 = w2.shape[0]
    n_eps = w3e.shape[1]
    k3 = w3.shape[0]
    n_out = w4.shape[0]

    n_cat = n2 + n_eps
    n_cat_p = _round_up(n_cat + 1, cat_align)   # +1 constant-one bias lane
    k3p = _round_up(k3, k_tile)

    w1t = np.ascontiguousarray(w1.T).astype(np.float32)                # (n_x, n1)
    b1r = b1.reshape(1, -1).astype(np.float32)
    w2t = np.zeros((n1, n_cat_p), np.float32); w2t[:, :n2] = w2.T       # padded cols
    b2r = np.zeros((1, n_cat_p), np.float32);  b2r[0, :n2] = b2

    # Fused fc3: [h2 | eps | 1 | 0...] @ [W3^T ; W3e^T ; (b3+b3e) ; 0...].
    # All entries are 0 / +-1 / -2 -> exactly representable in bf16.
    w3cat = np.zeros((n_cat_p, k3p), np.float32)
    w3cat[:n2, :k3] = w3.T
    w3cat[n2:n2 + n_eps, :k3] = w3e.T
    w3cat[n_cat, :k3] = b3 + b3e

    # Padded k3 rows of w4 are zero; padded fc3 columns give h3 = relu(0) = 0,
    # so padding contributes nothing.
    w4t = np.zeros((k3p, n_out), np.float32); w4t[:k3, :] = w4.T
    b4r = b4.reshape(1, -1).astype(np.float32)

    params = (jnp.asarray(w1t), jnp.asarray(b1r),
              jnp.asarray(w2t), jnp.asarray(b2r),
              jnp.asarray(w3cat, jnp.bfloat16),
              jnp.asarray(w4t), jnp.asarray(b4r))
    meta = dict(n_x=n_x, n1=n1, n2=n2, n_eps=n_eps, n_cat=n_cat,
                n_cat_p=n_cat_p, k3=k3, k3p=k3p, n_out=n_out, k_tile=k_tile)
    return params, meta


# ----------------------------------------------------------------------------
# Pure-JAX reference (mirrors OcclusionLayer.forward, un-fused, f32).
# ----------------------------------------------------------------------------
def reference_forward(x, eps, dense):
    (w1, b1, w2, b2, w3, b3, w3e, b3e, w4, b4) = [
        jnp.asarray(a, jnp.float32) for a in dense]
    h = jnp.maximum(x @ w1.T + b1, 0.0)
    h = jnp.maximum(h @ w2.T + b2, 0.0)
    h = jnp.maximum(h @ w3.T + b3 + eps @ w3e.T + b3e, 0.0)
    h = jnp.maximum(h @ w4.T + b4, 0.0)
    return h


if __name__ == "__main__":
    # Small config: image (C=3, H=16, W=16), model first layer = Linear(768, 32),
    # batch of 256 occlusion queries -> grid (1 batch tile, 2 K tiles of 256).
    C, H, W = 3, 16, 16
    out_features = 32
    B = 256

    key = jax.random.PRNGKey(0)
    k_img, k_w, k_b, k_x, k_eps = jax.random.split(key, 5)

    image = np.asarray(jax.random.uniform(k_img, (C, H, W), jnp.float32))
    fl_weight = np.asarray(
        jax.random.normal(k_w, (out_features, C * H * W), jnp.float32) * 0.05)
    fl_bias = np.asarray(
        jax.random.normal(k_b, (out_features,), jnp.float32) * 0.1)

    dense = build_dense_params(image, fl_weight, fl_bias, shrink=True)
    params, meta = pack_kernel_params(dense, k_tile=256)

    x = jax.random.normal(k_x, (B, 4), jnp.float32)           # occlusion box params
    eps = jax.random.uniform(k_eps, (B, H + W), jnp.float32)  # per-row/col epsilons

    out = occlusion_forward(x, eps, params, meta, block_b=1024, block_k=256)
    out = jax.block_until_ready(out)

    ref = reference_forward(x, eps, dense)
    # bf16 activations feed the fused fc3 MXU matmul (per perf review); all
    # accumulation stays f32, so deviation vs the f32 reference is ~1e-2-level.
    np.testing.assert_allclose(np.asarray(out), np.asarray(ref),
                               rtol=2e-2, atol=7e-2)

    print("KERNEL_OK")
</pallas_src>

<mosaic_0001>
module attributes {stable_mosaic.version = 11 : i64} {
  func.func @_occlusion_kernel(%arg0: i32, %arg1: i32, %arg2: memref<256x4xf32, #tpu.memory_space<vmem>>, %arg3: memref<256x128xbf16, #tpu.memory_space<vmem>>, %arg4: memref<4x64xf32, #tpu.memory_space<vmem>>, %arg5: memref<1x64xf32, #tpu.memory_space<vmem>>, %arg6: memref<64x128xf32, #tpu.memory_space<vmem>>, %arg7: memref<1x128xf32, #tpu.memory_space<vmem>>, %arg8: memref<128x256xbf16, #tpu.memory_space<vmem>>, %arg9: memref<256x32xf32, #tpu.memory_space<vmem>>, %arg10: memref<1x32xf32, #tpu.memory_space<vmem>>, %arg11: memref<256x32xf32, #tpu.memory_space<vmem>>, %arg12: memref<256x128xbf16, #tpu.memory_space<vmem>>) attributes {dimension_semantics = [#tpu.dimension_semantics<parallel>, #tpu.dimension_semantics<arbitrary>], iteration_bounds = array<i64: 1, 2>, scalar_prefetch = 0 : i64, scratch_operands = 1 : i64, tpu.core_type = #tpu.core_type<tc>, window_params = [{transform_indices = @transform_0, window_bounds = array<i64: 256, 4>}, {transform_indices = @transform_1, window_bounds = array<i64: 256, 128>}, {pipeline_mode = #tpu.pipeline_mode<synchronous>, transform_indices = @transform_2, window_bounds = array<i64: 4, 64>}, {pipeline_mode = #tpu.pipeline_mode<synchronous>, transform_indices = @transform_3, window_bounds = array<i64: 1, 64>}, {pipeline_mode = #tpu.pipeline_mode<synchronous>, transform_indices = @transform_4, window_bounds = array<i64: 64, 128>}, {pipeline_mode = #tpu.pipeline_mode<synchronous>, transform_indices = @transform_5, window_bounds = array<i64: 1, 128>}, {transform_indices = @transform_6, window_bounds = array<i64: 128, 256>}, {transform_indices = @transform_7, window_bounds = array<i64: 256, 32>}, {pipeline_mode = #tpu.pipeline_mode<synchronous>, transform_indices = @transform_8, window_bounds = array<i64: 1, 32>}, {transform_indices = @transform_9, window_bounds = array<i64: 256, 32>}]} {
    %c0_i32 = arith.constant 0 : i32
    %0 = arith.cmpi eq, %arg1, %c0_i32 : i32
    %1 = arith.extui %0 : i1 to i32
    %c0_i32_0 = arith.constant 0 : i32
    %2 = arith.cmpi ne, %1, %c0_i32_0 : i32
    scf.if %2 {
      %c0_13 = arith.constant 0 : index
      %c0_14 = arith.constant 0 : index
      %16 = vector.load %arg2[%c0_13, %c0_14] : memref<256x4xf32, #tpu.memory_space<vmem>>, vector<256x4xf32>
      %c0_15 = arith.constant 0 : index
      %c0_16 = arith.constant 0 : index
      %17 = vector.load %arg4[%c0_15, %c0_16] : memref<4x64xf32, #tpu.memory_space<vmem>>, vector<4x64xf32>
      %cst_17 = arith.constant dense<0.000000e+00> : vector<256x64xf32>
      %18 = tpu.matmul %16, %17, %cst_17 {dimension_numbers = #tpu.dot_dimension_numbers<[1], [0], [0], [1], [0, 0, 1, 1], [], []>} : vector<256x4xf32>, vector<4x64xf32>, vector<256x64xf32> -> vector<256x64xf32>
      %c0_18 = arith.constant 0 : index
      %c0_19 = arith.constant 0 : index
      %19 = vector.load %arg5[%c0_18, %c0_19] : memref<1x64xf32, #tpu.memory_space<vmem>>, vector<1x64xf32>
      %20 = vector.broadcast %19 : vector<1x64xf32> to vector<256x64xf32>
      %21 = arith.addf %18, %20 : vector<256x64xf32>
      %cst_20 = arith.constant 0.000000e+00 : f32
      %22 = vector.broadcast %cst_20 : f32 to vector<256x64xf32>
      %23 = arith.maximumf %21, %22 : vector<256x64xf32>
      %c0_21 = arith.constant 0 : index
      %c0_22 = arith.constant 0 : index
      %24 = vector.load %arg6[%c0_21, %c0_22] : memref<64x128xf32, #tpu.memory_space<vmem>>, vector<64x128xf32>
      %cst_23 = arith.constant dense<0.000000e+00> : vector<256x128xf32>
      %25 = tpu.matmul %23, %24, %cst_23 {dimension_numbers = #tpu.dot_dimension_numbers<[1], [0], [0], [1], [0, 0, 1, 1], [], []>} : vector<256x64xf32>, vector<64x128xf32>, vector<256x128xf32> -> vector<256x128xf32>
      %c0_24 = arith.constant 0 : index
      %c0_25 = arith.constant 0 : index
      %26 = vector.load %arg7[%c0_24, %c0_25] : memref<1x128xf32, #tpu.memory_space<vmem>>, vector<1x128xf32>
      %27 = vector.broadcast %26 : vector<1x128xf32> to vector<256x128xf32>
      %28 = arith.addf %25, %27 : vector<256x128xf32>
      %cst_26 = arith.constant 0.000000e+00 : f32
      %29 = vector.broadcast %cst_26 : f32 to vector<256x128xf32>
      %30 = arith.maximumf %28, %29 : vector<256x128xf32>
      %c0_27 = arith.constant 0 : index
      %c0_28 = arith.constant 0 : index
      %31 = vector.load %arg3[%c0_27, %c0_28] : memref<256x128xbf16, #tpu.memory_space<vmem>>, vector<256x128xbf16>
      %32 = arith.truncf %30 : vector<256x128xf32> to vector<256x128xbf16>
      %33 = arith.addf %31, %32 : vector<256x128xbf16>
      %c0_29 = arith.constant 0 : index
      %c0_30 = arith.constant 0 : index
      %34 = vector.load %arg12[%c0_29, %c0_30] : memref<256x128xbf16, #tpu.memory_space<vmem>>, vector<256x128xbf16>
      tpu.vector_store %arg12[%c0_29, %c0_30], %33 {strides = array<i32>} : memref<256x128xbf16, #tpu.memory_space<vmem>>, vector<256x128xbf16>,
      %cst_31 = arith.constant 0.000000e+00 : f32
      %35 = vector.broadcast %cst_31 : f32 to vector<256x32xf32>
      %c0_32 = arith.constant 0 : index
      %c0_33 = arith.constant 0 : index
      %36 = vector.load %arg11[%c0_32, %c0_33] : memref<256x32xf32, #tpu.memory_space<vmem>>, vector<256x32xf32>
      tpu.vector_store %arg11[%c0_32, %c0_33], %35 {strides = array<i32>} : memref<256x32xf32, #tpu.memory_space<vmem>>, vector<256x32xf32>,
    } else {
    }
    %c0 = arith.constant 0 : index
    %c0_1 = arith.constant 0 : index
    %3 = vector.load %arg12[%c0, %c0_1] : memref<256x128xbf16, #tpu.memory_space<vmem>>, vector<256x128xbf16>
    %c0_2 = arith.constant 0 : index
    %c0_3 = arith.constant 0 : index
    %4 = vector.load %arg8[%c0_2, %c0_3] : memref<128x256xbf16, #tpu.memory_space<vmem>>, vector<128x256xbf16>
    %cst = arith.constant dense<0.000000e+00> : vector<256x256xf32>
    %5 = tpu.matmul %3, %4, %cst {dimension_numbers = #tpu.dot_dimension_numbers<[1], [0], [0], [1], [0, 0, 1, 1], [], []>} : vector<256x128xbf16>, vector<128x256xbf16>, vector<256x256xf32> -> vector<256x256xf32>
    %cst_4 = arith.constant 0.000000e+00 : f32
    %6 = vector.broadcast %cst_4 : f32 to vector<256x256xf32>
    %7 = arith.maximumf %5, %6 : vector<256x256xf32>
    %c0_5 = arith.constant 0 : index
    %c0_6 = arith.constant 0 : index
    %8 = vector.load %arg11[%c0_5, %c0_6] : memref<256x32xf32, #tpu.memory_space<vmem>>, vector<256x32xf32>
    %c0_7 = arith.constant 0 : index
    %c0_8 = arith.constant 0 : index
    %9 = vector.load %arg9[%c0_7, %c0_8] : memref<256x32xf32, #tpu.memory_space<vmem>>, vector<256x32xf32>
    %cst_9 = arith.constant dense<0.000000e+00> : vector<256x32xf32>
    %10 = tpu.matmul %7, %9, %cst_9 {dimension_numbers = #tpu.dot_dimension_numbers<[1], [0], [0], [1], [0, 0, 1, 1], [], []>} : vector<256x256xf32>, vector<256x32xf32>, vector<256x32xf32> -> vector<256x32xf32>
    %11 = arith.addf %8, %10 : vector<256x32xf32>
    %c0_10 = arith.constant 0 : index
    %c0_11 = arith.constant 0 : index
    %12 = vector.load %arg11[%c0_10, %c0_11] : memref<256x32xf32, #tpu.memory_space<vmem>>, vector<256x32xf32>
    tpu.vector_store %arg11[%c0_10, %c0_11], %11 {strides = array<i32>} : memref<256x32xf32, #tpu.memory_space<vmem>>, vector<256x32xf32>,
    %c1_i32 = arith.constant 1 : i32
    %13 = arith.cmpi eq, %arg1, %c1_i32 : i32
    %14 = arith.extui %13 : i1 to i32
    %c0_i32_12 = arith.constant 0 : i32
    %15 = arith.cmpi ne, %14, %c0_i32_12 : i32
    scf.if %15 {
      %c0_13 = arith.constant 0 : index
      %c0_14 = arith.constant 0 : index
      %16 = vector.load %arg11[%c0_13, %c0_14] : memref<256x32xf32, #tpu.memory_space<vmem>>, vector<256x32xf32>
      %c0_15 = arith.constant 0 : index
      %c0_16 = arith.constant 0 : index
      %17 = vector.load %arg10[%c0_15, %c0_16] : memref<1x32xf32, #tpu.memory_space<vmem>>, vector<1x32xf32>
      %18 = vector.broadcast %17 : vector<1x32xf32> to vector<256x32xf32>
      %19 = arith.addf %16, %18 : vector<256x32xf32>
      %cst_17 = arith.constant 0.000000e+00 : f32
      %20 = vector.broadcast %cst_17 : f32 to vector<256x32xf32>
      %21 = arith.maximumf %19, %20 : vector<256x32xf32>
      %c0_18 = arith.constant 0 : index
      %c0_19 = arith.constant 0 : index
      %22 = vector.load %arg11[%c0_18, %c0_19] : memref<256x32xf32, #tpu.memory_space<vmem>>, vector<256x32xf32>
      tpu.vector_store %arg11[%c0_18, %c0_19], %21 {strides = array<i32>} : memref<256x32xf32, #tpu.memory_space<vmem>>, vector<256x32xf32>,
    } else {
    }
    return
  }
  func.func @transform_0(%arg0: i32, %arg1: i32) -> (i32, i32) {
    %c0_i32 = arith.constant 0 : i32
    %c0_i32_0 = arith.constant 0 : i32
    return %arg0, %c0_i32 : i32, i32
  }
  func.func @transform_1(%arg0: i32, %arg1: i32) -> (i32, i32) {
    %c0_i32 = arith.constant 0 : i32
    %c0_i32_0 = arith.constant 0 : i32
    return %arg0, %c0_i32 : i32, i32
  }
  func.func @transform_2(%arg0: i32, %arg1: i32) -> (i32, i32) {
    %c0_i32 = arith.constant 0 : i32
    %c0_i32_0 = arith.constant 0 : i32
    %c0_i32_1 = arith.constant 0 : i32
    return %c0_i32, %c0_i32_0 : i32, i32
  }
  func.func @transform_3(%arg0: i32, %arg1: i32) -> (i32, i32) {
    %c0_i32 = arith.constant 0 : i32
    %c0_i32_0 = arith.constant 0 : i32
    %c0_i32_1 = arith.constant 0 : i32
    return %c0_i32, %c0_i32_0 : i32, i32
  }
  func.func @transform_4(%arg0: i32, %arg1: i32) -> (i32, i32) {
    %c0_i32 = arith.constant 0 : i32
    %c0_i32_0 = arith.constant 0 : i32
    %c0_i32_1 = arith.constant 0 : i32
    return %c0_i32, %c0_i32_0 : i32, i32
  }
  func.func @transform_5(%arg0: i32, %arg1: i32) -> (i32, i32) {
    %c0_i32 = arith.constant 0 : i32
    %c0_i32_0 = arith.constant 0 : i32
    %c0_i32_1 = arith.constant 0 : i32
    return %c0_i32, %c0_i32_0 : i32, i32
  }
  func.func @transform_6(%arg0: i32, %arg1: i32) -> (i32, i32) {
    %c0_i32 = arith.constant 0 : i32
    %c0_i32_0 = arith.constant 0 : i32
    return %c0_i32, %arg1 : i32, i32
  }
  func.func @transform_7(%arg0: i32, %arg1: i32) -> (i32, i32) {
    %c0_i32 = arith.constant 0 : i32
    %c0_i32_0 = arith.constant 0 : i32
    return %arg1, %c0_i32 : i32, i32
  }
  func.func @transform_8(%arg0: i32, %arg1: i32) -> (i32, i32) {
    %c0_i32 = arith.constant 0 : i32
    %c0_i32_0 = arith.constant 0 : i32
    %c0_i32_1 = arith.constant 0 : i32
    return %c0_i32, %c0_i32_0 : i32, i32
  }
  func.func @transform_9(%arg0: i32, %arg1: i32) -> (i32, i32) {
    %c0_i32 = arith.constant 0 : i32
    %c0_i32_0 = arith.constant 0 : i32
    return %arg0, %c0_i32 : i32, i32
  }
}

</mosaic_0001>

<llo_original>
// kernel: tpu_custom_call.1
$region0: #{tpu_custom_call.1}
  #allocation0 [shape = 'u32[]', space=smem, size = 0x4, offset = 0x4, fixed_abs, tag = 'smem constant byte address 0x4 - core index']
  #allocation1 [shape = 'u32[72,128]{1,0:T(1,128)}', space=vmem, size = 0x9000, scoped, tag = 'internal scratch']
  #allocation2 [shape = 'bf16[256,128]{1,0:T(8,128)(2,1)}', space=vmem, size = 0x10000, scoped, tag = 'scratch operand']
  %s0 = inlined_call_operand.vmem [shape: f32[256,4], index: 0, kind: input, shape index: {}]
  %s1 = inlined_call_operand.vmem [shape: bf16[256,128], index: 1, kind: input, shape index: {}]
  %s2 = inlined_call_operand.vmem [shape: f32[4,64], index: 2, kind: input, shape index: {}]
  %s3 = inlined_call_operand.vmem [shape: f32[1,64], index: 3, kind: input, shape index: {}]
  %s4 = inlined_call_operand.vmem [shape: f32[64,128], index: 4, kind: input, shape index: {}]
  %s5 = inlined_call_operand.vmem [shape: f32[1,128], index: 5, kind: input, shape index: {}]
  %s6 = inlined_call_operand.vmem [shape: bf16[128,512], index: 6, kind: input, shape index: {}]
  %s7 = inlined_call_operand.vmem [shape: f32[512,32], index: 7, kind: input, shape index: {}]
  %s8 = inlined_call_operand.vmem [shape: f32[1,32], index: 8, kind: input, shape index: {}]
  %s9 = inlined_call_operand.vmem [shape: f32[256,32], index: 9, kind: output, shape index: {}]
  %s10 = sld [smem:[#allocation0]]
  $region115: #{tpu_custom_call.1} parent=0
    _
  %s12 = ssub.s32 1, %s10
  %s13 = scalar_select 0, %s12, %s10
  $region1: #{tpu_custom_call.1} parent=0
    #allocation3 [shape = 'u8[131072]{0}', space=vmem, size = 0x20000, scoped, tag = 'input window, operand 6']
    loop: start=0, step=1, limit=4
    $region2: #{tpu_custom_call.1} parent=1 // loop_pre_header
      _
    $region3: #{tpu_custom_call.1} parent=1 // loop_header
      %s15 = sphi 0, %s19
      %p16 = scmp.ge.s32.totalorder %s15, 4
      %s22 = sphi 0, %s34
      %s23 = sphi 0, %s30
      %s24 = sphi 0, %s22
      %s25 = sphi 0, %s23
      %s26 = sphi 0, %s24
      %s27 = sphi 0, %s25
      %s37 = sphi 0, %s39
      %s40 = sphi 0, %s37
      %s41 = sphi 0, %s40
      %s57 = sphi 0, %s41
      %s63 = sphi 0, %s65
      %s66 = sphi 0, %s63
      %s67 = sphi 0, %s66
      %s83 = sphi 0, %s67
      %s87 = sphi 0, %s87
      %s89 = sphi 0, %s87
      %s90 = sphi 0, %s89
      %s104 = sphi 0, %s90
      %s108 = sphi 0, %s108
      %s110 = sphi 0, %s108
      %s111 = sphi 0, %s110
      %s125 = sphi 0, %s111
      %s129 = sphi 0, %s129
      %s131 = sphi 0, %s129
      %s132 = sphi 0, %s131
      %s146 = sphi 0, %s132
      %s150 = sphi 0, %s150
      %s152 = sphi 0, %s150
      %s153 = sphi 0, %s152
      %s167 = sphi 0, %s153
      %s173 = sphi 0, %s175
      %s176 = sphi 0, %s173
      %s177 = sphi 0, %s176
      %s193 = sphi 0, %s177
      %s199 = sphi 0, %s201
      %s202 = sphi 0, %s199
      %s203 = sphi 0, %s202
      %s219 = sphi 0, %s203
      %s223 = sphi 0, %s223
      %s225 = sphi 0, %s223
      %s226 = sphi 0, %s225
      %s240 = sphi 0, %s226
      %s246 = sphi 0, %s248
      %s249 = sphi 0, %s246
      %s250 = sphi 0, %s249
      %s266 = sphi 0, %s250
    $region4: #{tpu_custom_call.1} parent=1 // loop_header_branch
      %18 = sbr.rel (%p16) target = $region8
    $region5: #{tpu_custom_call.1} parent=1 // loop_body
      %s20 = ssub.s32 %s15, 1
      %s21 = ssub.s32 %s15, 2
      %s28 = sadd.s32 1, %s23
      %p29 = scmp.ge.s32.totalorder %s28, 2
      %s30 = scalar_select %p29, 0, %s28
      %s31 = sadd.s32 1, %s22
      %s32 = scalar_select %p29, %s31, %s22
      %p33 = scmp.ge.s32.totalorder %s32, 1
      %s34 = scalar_select %p33, 0, %s32
      %s35 = ssub.s32 %s22, %s34
      %p36 = scmp.eq.s32.totalorder %s35, 0
      %s38 = sadd.s32 %s37, 1
      %s39 = scalar_select %p36, %s37, %s38
      %p42 = pneg %p36
      %p43 = scmp.eq.s32.totalorder %s15, 1
      %p44 = por %p42, %p43
      %p45 = scmp.ne.s32.totalorder %s37, %s40
      %p46 = scmp.eq.s32.totalorder %s15, 0
      %p47 = por %p45, %p46
      %p48 = scmp.ne.s32.totalorder %s37, %s40
      %p49 = scmp.eq.s32.totalorder %s20, 1
      %p50 = por %p48, %p49
      %p51 = scmp.ne.s32.totalorder %s40, %s41
      %p52 = scmp.eq.s32.totalorder %s20, 0
      %p53 = por %p51, %p52
      %p54 = scmp.ne.s32.totalorder %s40, %s41
      %p55 = scmp.eq.s32.totalorder %s21, 1
      %p56 = por %p54, %p55
      %p58 = scmp.ne.s32.totalorder %s41, %s57
      %p59 = scmp.eq.s32.totalorder %s21, 0
      %p60 = por %p58, %p59
      %s61 = ssub.s32 %s22, %s34
      %p62 = scmp.eq.s32.totalorder %s61, 0
      %s64 = sadd.s32 %s63, 1
      %s65 = scalar_select %p62, %s63, %s64
      %p68 = pneg %p62
      %p69 = scmp.eq.s32.totalorder %s15, 1
      %p70 = por %p68, %p69
      %p71 = scmp.ne.s32.totalorder %s63, %s66
      %p72 = scmp.eq.s32.totalorder %s15, 0
      %p73 = por %p71, %p72
      %p74 = scmp.ne.s32.totalorder %s63, %s66
      %p75 = scmp.eq.s32.totalorder %s20, 1
      %p76 = por %p74, %p75
      %p77 = scmp.ne.s32.totalorder %s66, %s67
      %p78 = scmp.eq.s32.totalorder %s20, 0
      %p79 = por %p77, %p78
      %p80 = scmp.ne.s32.totalorder %s66, %s67
      %p81 = scmp.eq.s32.totalorder %s21, 1
      %p82 = por %p80, %p81
      %p84 = scmp.ne.s32.totalorder %s67, %s83
      %p85 = scmp.eq.s32.totalorder %s21, 0
      %p86 = por %p84, %p85
      %s88 = sadd.s32 %s87, 1
      %p91 = scmp.eq.s32.totalorder %s15, 1
      %p92 = scmp.ne.s32.totalorder %s87, %s89
      %p93 = scmp.eq.s32.totalorder %s15, 0
      %p94 = por %p92, %p93
      %p95 = scmp.ne.s32.totalorder %s87, %s89
      %p96 = scmp.eq.s32.totalorder %s20, 1
      %p97 = por %p95, %p96
      %p98 = scmp.ne.s32.totalorder %s89, %s90
      %p99 = scmp.eq.s32.totalorder %s20, 0
      %p100 = por %p98, %p99
      %p101 = scmp.ne.s32.totalorder %s89, %s90
      %p102 = scmp.eq.s32.totalorder %s21, 1
      %p103 = por %p101, %p102
      %p105 = scmp.ne.s32.totalorder %s90, %s104
      %p106 = scmp.eq.s32.totalorder %s21, 0
      %p107 = por %p105, %p106
      %s109 = sadd.s32 %s108, 1
      %p112 = scmp.eq.s32.totalorder %s15, 1
      %p113 = scmp.ne.s32.totalorder %s108, %s110
      %p114 = scmp.eq.s32.totalorder %s15, 0
      %p115 = por %p113, %p114
      %p116 = scmp.ne.s32.totalorder %s108, %s110
      %p117 = scmp.eq.s32.totalorder %s20, 1
      %p118 = por %p116, %p117
      %p119 = scmp.ne.s32.totalorder %s110, %s111
      %p120 = scmp.eq.s32.totalorder %s20, 0
      %p121 = por %p119, %p120
      %p122 = scmp.ne.s32.totalorder %s110, %s111
      %p123 = scmp.eq.s32.totalorder %s21, 1
      %p124 = por %p122, %p123
      %p126 = scmp.ne.s32.totalorder %s111, %s125
      %p127 = scmp.eq.s32.totalorder %s21, 0
      %p128 = por %p126, %p127
      %s130 = sadd.s32 %s129, 1
      %p133 = scmp.eq.s32.totalorder %s15, 1
      %p134 = scmp.ne.s32.totalorder %s129, %s131
      %p135 = scmp.eq.s32.totalorder %s15, 0
      %p136 = por %p134, %p135
      %p137 = scmp.ne.s32.totalorder %s129, %s131
      %p138 = scmp.eq.s32.totalorder %s20, 1
      %p139 = por %p137, %p138
      %p140 = scmp.ne.s32.totalorder %s131, %s132
      %p141 = scmp.eq.s32.totalorder %s20, 0
      %p142 = por %p140, %p141
      %p143 = scmp.ne.s32.totalorder %s131, %s132
      %p144 = scmp.eq.s32.totalorder %s21, 1
      %p145 = por %p143, %p144
      %p147 = scmp.ne.s32.totalorder %s132, %s146
      %p148 = scmp.eq.s32.totalorder %s21, 0
      %p149 = por %p147, %p148
      %s151 = sadd.s32 %s150, 1
      %p154 = scmp.eq.s32.totalorder %s15, 1
      %p155 = scmp.ne.s32.totalorder %s150, %s152
      %p156 = scmp.eq.s32.totalorder %s15, 0
      %p157 = por %p155, %p156
      %p158 = scmp.ne.s32.totalorder %s150, %s152
      %p159 = scmp.eq.s32.totalorder %s20, 1
      %p160 = por %p158, %p159
      %p161 = scmp.ne.s32.totalorder %s152, %s153
      %p162 = scmp.eq.s32.totalorder %s20, 0
      %p163 = por %p161, %p162
      %p164 = scmp.ne.s32.totalorder %s152, %s153
      %p165 = scmp.eq.s32.totalorder %s21, 1
      %p166 = por %p164, %p165
      %p168 = scmp.ne.s32.totalorder %s153, %s167
      %p169 = scmp.eq.s32.totalorder %s21, 0
      %p170 = por %p168, %p169
      %s171 = ssub.s32 %s23, %s30
      %p172 = scmp.eq.s32.totalorder %s171, 0
      %s174 = sadd.s32 %s173, 1
      %s175 = scalar_select %p172, %s173, %s174
      %p178 = pneg %p172
      %p179 = scmp.eq.s32.totalorder %s15, 1
      %p180 = por %p178, %p179
      %p181 = scmp.ne.s32.totalorder %s173, %s176
      %p182 = scmp.eq.s32.totalorder %s15, 0
      %p183 = por %p181, %p182
      %p184 = scmp.ne.s32.totalorder %s173, %s176
      %p185 = scmp.eq.s32.totalorder %s20, 1
      %p186 = por %p184, %p185
      %p187 = scmp.ne.s32.totalorder %s176, %s177
      %p188 = scmp.eq.s32.totalorder %s20, 0
      %p189 = por %p187, %p188
      %p190 = scmp.ne.s32.totalorder %s176, %s177
      %p191 = scmp.eq.s32.totalorder %s21, 1
      %p192 = por %p190, %p191
      %p194 = scmp.ne.s32.totalorder %s177, %s193
      %p195 = scmp.eq.s32.totalorder %s21, 0
      %p196 = por %p194, %p195
      %s197 = ssub.s32 %s23, %s30
      %p198 = scmp.eq.s32.totalorder %s197, 0
      %s200 = sadd.s32 %s199, 1
      %s201 = scalar_select %p198, %s199, %s200
      %p204 = pneg %p198
      %p205 = scmp.eq.s32.totalorder %s15, 1
      %p206 = por %p204, %p205
      %p207 = scmp.ne.s32.totalorder %s199, %s202
      %p208 = scmp.eq.s32.totalorder %s15, 0
      %p209 = por %p207, %p208
      %p210 = scmp.ne.s32.totalorder %s199, %s202
      %p211 = scmp.eq.s32.totalorder %s20, 1
      %p212 = por %p210, %p211
      %p213 = scmp.ne.s32.totalorder %s202, %s203
      %p214 = scmp.eq.s32.totalorder %s20, 0
      %p215 = por %p213, %p214
      %p216 = scmp.ne.s32.totalorder %s202, %s203
      %p217 = scmp.eq.s32.totalorder %s21, 1
      %p218 = por %p216, %p217
      %p220 = scmp.ne.s32.totalorder %s203, %s219
      %p221 = scmp.eq.s32.totalorder %s21, 0
      %p222 = por %p220, %p221
      %s224 = sadd.s32 %s223, 1
      %p227 = scmp.eq.s32.totalorder %s15, 1
      %p228 = scmp.ne.s32.totalorder %s223, %s225
      %p229 = scmp.eq.s32.totalorder %s15, 0
      %p230 = por %p228, %p229
      %p231 = scmp.ne.s32.totalorder %s223, %s225
      %p232 = scmp.eq.s32.totalorder %s20, 1
      %p233 = por %p231, %p232
      %p234 = scmp.ne.s32.totalorder %s225, %s226
      %p235 = scmp.eq.s32.totalorder %s20, 0
      %p236 = por %p234, %p235
      %p237 = scmp.ne.s32.totalorder %s225, %s226
      %p238 = scmp.eq.s32.totalorder %s21, 1
      %p239 = por %p237, %p238
      %p241 = scmp.ne.s32.totalorder %s226, %s240
      %p242 = scmp.eq.s32.totalorder %s21, 0
      %p243 = por %p241, %p242
      %s244 = ssub.s32 %s22, %s34
      %p245 = scmp.eq.s32.totalorder %s244, 0
      %s247 = sadd.s32 %s246, 1
      %s248 = scalar_select %p245, %s246, %s247
      %p251 = pneg %p245
      %p252 = scmp.eq.s32.totalorder %s15, 1
      %p253 = por %p251, %p252
      %p254 = scmp.ne.s32.totalorder %s246, %s249
      %p255 = scmp.eq.s32.totalorder %s15, 0
      %p256 = por %p254, %p255
      %p257 = scmp.ne.s32.totalorder %s246, %s249
      %p258 = scmp.eq.s32.totalorder %s20, 1
      %p259 = por %p257, %p258
      %p260 = scmp.ne.s32.totalorder %s249, %s250
      %p261 = scmp.eq.s32.totalorder %s20, 0
      %p262 = por %p260, %p261
      %p263 = scmp.ne.s32.totalorder %s249, %s250
      %p264 = scmp.eq.s32.totalorder %s21, 1
      %p265 = por %p263, %p264
      %p267 = scmp.ne.s32.totalorder %s250, %s266
      %p268 = scmp.eq.s32.totalorder %s21, 0
      %p269 = por %p267, %p268
      %p270 = scmp.le.s32.totalorder 1, %s15
      %p271 = scmp.lt.s32.totalorder %s15, 3
      %p272 = pnand %p270, %p271
      %p273 = pneg %p272
      // Predicated region
      $region9: #{tpu_custom_call.1} parent=5 // pred_check
        _
      $region10: #{tpu_custom_call.1} parent=5 // pred_check_branch
        %275 = sbr.rel (%p272) target = $region12
      $region11: #{tpu_custom_call.1} parent=5 // pred_region
        %s276 = ssub.s32 %s15, 1
        // Predicated region
        $region13: #{tpu_custom_call.1} parent=11 // pred_check
          %p277 = pneg %p53
        $region14: #{tpu_custom_call.1} parent=11 // pred_check_branch
          %279 = sbr.rel (%p277) target = $region16
        $region15: #{tpu_custom_call.1} parent=11 // pred_region
          %s280 = smul.u32 32, %s24
          %p281 = scmp.lt.s32.totalorder %s280, 31
          %s282 = scalar_select %p281, %s280, 31
          %s283 = smul.addr %s282, 8
          %s284 = scalar_lea.vmem %s0, %s283
          %s285 = smul.u32 32, %s24
        $region16: #{tpu_custom_call.1} parent=11 // pred_fallthru
          _
        // Predicated region
        $region17: #{tpu_custom_call.1} parent=11 // pred_check
          %p286 = pneg %p79
        $region18: #{tpu_custom_call.1} parent=11 // pred_check_branch
          %288 = sbr.rel (%p286) target = $region20
        $region19: #{tpu_custom_call.1} parent=11 // pred_region
          %s289 = smul.u32 32, %s24
          %p290 = scmp.lt.s32.totalorder %s289, 31
          %s291 = scalar_select %p290, %s289, 31
          %s292 = smul.addr %s291, 4
          %s293 = scalar_lea.vmem %s1, %s292
          %s294 = smul.u32 32, %s24
        $region20: #{tpu_custom_call.1} parent=11 // pred_fallthru
          _
        // Predicated region
        $region21: #{tpu_custom_call.1} parent=11 // pred_check
          %p295 = pneg %p100
        $region22: #{tpu_custom_call.1} parent=11 // pred_check_branch
          %297 = sbr.rel (%p295) target = $region24
        $region23: #{tpu_custom_call.1} parent=11 // pred_region
          _
        $region24: #{tpu_custom_call.1} parent=11 // pred_fallthru
          _
        // Predicated region
        $region25: #{tpu_custom_call.1} parent=11 // pred_check
          %p298 = pneg %p121
        $region26: #{tpu_custom_call.1} parent=11 // pred_check_branch
          %300 = sbr.rel (%p298) target = $region28
        $region27: #{tpu_custom_call.1} parent=11 // pred_region
          _
        $region28: #{tpu_custom_call.1} parent=11 // pred_fallthru
          _
        // Predicated region
        $region29: #{tpu_custom_call.1} parent=11 // pred_check
          %p301 = pneg %p142
        $region30: #{tpu_custom_call.1} parent=11 // pred_check_branch
          %303 = sbr.rel (%p301) target = $region32
        $region31: #{tpu_custom_call.1} parent=11 // pred_region
          _
        $region32: #{tpu_custom_call.1} parent=11 // pred_fallthru
          _
        // Predicated region
        $region33: #{tpu_custom_call.1} parent=11 // pred_check
          %p304 = pneg %p163
        $region34: #{tpu_custom_call.1} parent=11 // pred_check_branch
          %306 = sbr.rel (%p304) target = $region36
        $region35: #{tpu_custom_call.1} parent=11 // pred_region
          _
        $region36: #{tpu_custom_call.1} parent=11 // pred_fallthru
          _
        // Predicated region
        $region37: #{tpu_custom_call.1} parent=11 // pred_check
          %p307 = pneg %p236
        $region38: #{tpu_custom_call.1} parent=11 // pred_check_branch
          %309 = sbr.rel (%p307) target = $region40
        $region39: #{tpu_custom_call.1} parent=11 // pred_region
          _
        $region40: #{tpu_custom_call.1} parent=11 // pred_fallthru
          _
      $region12: #{tpu_custom_call.1} parent=5 // pred_fallthru
        _
      %p310 = scmp.lt.s32.totalorder %s15, 2
      // Predicated region
      $region41: #{tpu_custom_call.1} parent=5 // pred_check
        %p311 = pneg %p310
      $region42: #{tpu_custom_call.1} parent=5 // pred_check_branch
        %313 = sbr.rel (%p311) target = $region44
      $region43: #{tpu_custom_call.1} parent=5 // pred_region
        // Predicated region
        $region45: #{tpu_custom_call.1} parent=43 // pred_check
          %p314 = pneg %p183
        $region46: #{tpu_custom_call.1} parent=43 // pred_check_branch
          %316 = sbr.rel (%p314) target = $region48
        $region47: #{tpu_custom_call.1} parent=43 // pred_region
          %s317 = sand.u32 %s173, 1
          %s318 = sand.u32 %s173, 1
          %s319 = smul.addr %s318, 128
          %s320 = scalar_lea.vmem [#allocation3], %s319
          %s321 = smul.u32 2, %s23
          %s322 = smul.addr %s321, 4
          %s323 = scalar_lea.vmem %s6, %s322
          // Predicated region
          $region49: #{tpu_custom_call.1} parent=47 // pred_check
            _
          $region50: #{tpu_custom_call.1} parent=47 // pred_check_branch
            %325 = sbr.rel (0) target = $region52
          $region51: #{tpu_custom_call.1} parent=47 // pred_region
            // Predicated region
            $region53: #{tpu_custom_call.1} parent=51 // pred_check
              _
            $region54: #{tpu_custom_call.1} parent=51 // pred_check_branch
              %327 = sbr.rel (0) target = $region56
            $region55: #{tpu_custom_call.1} parent=51 // pred_region
              // Predicated region
              $region68: #{tpu_custom_call.1} parent=55 // pred_check
                _
              $region69: #{tpu_custom_call.1} parent=55 // pred_check_branch
                %373 = sbr.rel (0) target = $region71
              $region70: #{tpu_custom_call.1} parent=55 // pred_region
                loop: start=0, step=1, limit=1
                $region72: #{tpu_custom_call.1} parent=70 // loop_pre_header
                  _
                $region73: #{tpu_custom_call.1} parent=70 // loop_header
                  %s375 = sphi 0, %s379
                  %p376 = scmp.ge.s32.totalorder %s375, 1
                  %s380 = sphi %s323, %s323
                  %s381 = sphi %s320, %s320
                $region74: #{tpu_custom_call.1} parent=70 // loop_header_branch
                  %378 = sbr.rel (%p376) target = $region78
                $region75: #{tpu_custom_call.1} parent=70 // loop_body
                  %v382 = vld [vmem:[%s380] sm:$0xff]
                  %383 = vst [vmem:[%s381] sm:$0xff] %v382
                  %v384 = vld [vmem:[%s380 + $0x10] sm:$0xff]
                  %385 = vst [vmem:[%s381 + $0x8] sm:$0xff] %v384
                  %v386 = vld [vmem:[%s380 + $0x20] sm:$0xff]
                  %387 = vst [vmem:[%s381 + $0x10] sm:$0xff] %v386
                  %v388 = vld [vmem:[%s380 + $0x30] sm:$0xff]
                  %389 = vst [vmem:[%s381 + $0x18] sm:$0xff] %v388
                  %v390 = vld [vmem:[%s380 + $0x40] sm:$0xff]
                  %391 = vst [vmem:[%s381 + $0x20] sm:$0xff] %v390
                  %v392 = vld [vmem:[%s380 + $0x50] sm:$0xff]
                  %393 = vst [vmem:[%s381 + $0x28] sm:$0xff] %v392
                  %v394 = vld [vmem:[%s380 + $0x60] sm:$0xff]
                  %395 = vst [vmem:[%s381 + $0x30] sm:$0xff] %v394
                  %v396 = vld [vmem:[%s380 + $0x70] sm:$0xff]
                  %397 = vst [vmem:[%s381 + $0x38] sm:$0xff] %v396
                  %v398 = vld [vmem:[%s380 + $0x80] sm:$0xff]
                  %399 = vst [vmem:[%s381 + $0x40] sm:$0xff] %v398
                  %v400 = vld [vmem:[%s380 + $0x90] sm:$0xff]
                  %401 = vst [vmem:[%s381 + $0x48] sm:$0xff] %v400
                  %v402 = vld [vmem:[%s380 + $0xa0] sm:$0xff]
                  %403 = vst [vmem:[%s381 + $0x50] sm:$0xff] %v402
                  %v404 = vld [vmem:[%s380 + $0xb0] sm:$0xff]
                  %405 = vst [vmem:[%s381 + $0x58] sm:$0xff] %v404
                  %v406 = vld [vmem:[%s380 + $0xc0] sm:$0xff]
                  %407 = vst [vmem:[%s381 + $0x60] sm:$0xff] %v406
                  %v408 = vld [vmem:[%s380 + $0xd0] sm:$0xff]
                  %409 = vst [vmem:[%s381 + $0x68] sm:$0xff] %v408
                  %v410 = vld [vmem:[%s380 + $0xe0] sm:$0xff]
                  %411 = vst [vmem:[%s381 + $0x70] sm:$0xff] %v410
                  %v412 = vld [vmem:[%s380 + $0xf0] sm:$0xff]
                  %413 = vst [vmem:[%s381 + $0x78] sm:$0xff] %v412
                $region76: #{tpu_custom_call.1} parent=70 // loop_footer
                  %s379 = sadd.s32 1, %s375
                $region77: #{tpu_custom_call.1} parent=70 // loop_footer_branch
                  %374 = sbr.rel target = $region73
                $region78: #{tpu_custom_call.1} parent=70 // loop_exit
                  _
              $region71: #{tpu_custom_call.1} parent=55 // pred_fallthru
                _
              // Predicated region
              $region79: #{tpu_custom_call.1} parent=55 // pred_check
                _
              $region80: #{tpu_custom_call.1} parent=55 // pred_check_branch
                %415 = sbr.rel target = $region82
              $region81: #{tpu_custom_call.1} parent=55 // pred_region
                _
              $region82: #{tpu_custom_call.1} parent=55 // pred_fallthru
                _
            $region56: #{tpu_custom_call.1} parent=51 // pred_fallthru
              _
            // Predicated region
            $region57: #{tpu_custom_call.1} parent=51 // pred_check
              _
            $region58: #{tpu_custom_call.1} parent=51 // pred_check_branch
              %329 = sbr.rel target = $region60
            $region59: #{tpu_custom_call.1} parent=51 // pred_region
              %s331 = ssub.s32 256, 1
              loop: start=0, step=1, limit=1
              $region61: #{tpu_custom_call.1} parent=59 // loop_pre_header
                _
              $region62: #{tpu_custom_call.1} parent=59 // loop_header
                %s333 = sphi 0, %s337
                %p334 = scmp.ge.s32.totalorder %s333, 1
                %s338 = sphi %s323, %s323
                %s339 = sphi %s320, %s320
              $region63: #{tpu_custom_call.1} parent=59 // loop_header_branch
                %336 = sbr.rel (%p334) target = $region67
              $region64: #{tpu_custom_call.1} parent=59 // loop_body
                %v340 = vld [vmem:[%s338] sm:%s331]
                %341 = vst [vmem:[%s339] sm:%s331] %v340
                %v342 = vld [vmem:[%s338 + $0x10] sm:%s331]
                %343 = vst [vmem:[%s339 + $0x8] sm:%s331] %v342
                %v344 = vld [vmem:[%s338 + $0x20] sm:%s331]
                %345 = vst [vmem:[%s339 + $0x10] sm:%s331] %v344
                %v346 = vld [vmem:[%s338 + $0x30] sm:%s331]
                %347 = vst [vmem:[%s339 + $0x18] sm:%s331] %v346
                %v348 = vld [vmem:[%s338 + $0x40] sm:%s331]
                %349 = vst [vmem:[%s339 + $0x20] sm:%s331] %v348
                %v350 = vld [vmem:[%s338 + $0x50] sm:%s331]
                %351 = vst [vmem:[%s339 + $0x28] sm:%s331] %v350
                %v352 = vld [vmem:[%s338 + $0x60] sm:%s331]
                %353 = vst [vmem:[%s339 + $0x30] sm:%s331] %v352
                %v354 = vld [vmem:[%s338 + $0x70] sm:%s331]
                %355 = vst [vmem:[%s339 + $0x38] sm:%s331] %v354
                %v356 = vld [vmem:[%s338 + $0x80] sm:%s331]
                %357 = vst [vmem:[%s339 + $0x40] sm:%s331] %v356
                %v358 = vld [vmem:[%s338 + $0x90] sm:%s331]
                %359 = vst [vmem:[%s339 + $0x48] sm:%s331] %v358
                %v360 = vld [vmem:[%s338 + $0xa0] sm:%s331]
                %361 = vst [vmem:[%s339 + $0x50] sm:%s331] %v360
                %v362 = vld [vmem:[%s338 + $0xb0] sm:%s331]
                %363 = vst [vmem:[%s339 + $0x58] sm:%s331] %v362
                %v364 = vld [vmem:[%s338 + $0xc0] sm:%s331]
                %365 = vst [vmem:[%s339 + $0x60] sm:%s331] %v364
                %v366 = vld [vmem:[%s338 + $0xd0] sm:%s331]
                %367 = vst [vmem:[%s339 + $0x68] sm:%s331] %v366
                %v368 = vld [vmem:[%s338 + $0xe0] sm:%s331]
                %369 = vst [vmem:[%s339 + $0x70] sm:%s331] %v368
                %v370 = vld [vmem:[%s338 + $0xf0] sm:%s331]
                %371 = vst [vmem:[%s339 + $0x78] sm:%s331] %v370
              $region65: #{tpu_custom_call.1} parent=59 // loop_footer
                %s337 = sadd.s32 1, %s333
              $region66: #{tpu_custom_call.1} parent=59 // loop_footer_branch
                %332 = sbr.rel target = $region62
              $region67: #{tpu_custom_call.1} parent=59 // loop_exit
                _
            $region60: #{tpu_custom_call.1} parent=51 // pred_fallthru
              _
          $region52: #{tpu_custom_call.1} parent=47 // pred_fallthru
            _
          %416 = vnop
        $region48: #{tpu_custom_call.1} parent=43 // pred_fallthru
          _
        // Predicated region
        $region83: #{tpu_custom_call.1} parent=43 // pred_check
          %p417 = pneg %p209
        $region84: #{tpu_custom_call.1} parent=43 // pred_check_branch
          %419 = sbr.rel (%p417) target = $region86
        $region85: #{tpu_custom_call.1} parent=43 // pred_region
          %s420 = smul.u32 32, %s23
          %p421 = scmp.lt.s32.totalorder %s420, 63
          %s422 = scalar_select %p421, %s420, 63
          %s423 = smul.addr %s422, 8
          %s424 = scalar_lea.vmem %s7, %s423
          %s425 = smul.u32 32, %s23
        $region86: #{tpu_custom_call.1} parent=43 // pred_fallthru
          _
      $region44: #{tpu_custom_call.1} parent=5 // pred_fallthru
        _
      %p426 = scmp.le.s32.totalorder 1, %s15
      %p427 = scmp.lt.s32.totalorder %s15, 3
      %p428 = pnand %p426, %p427
      %p429 = pneg %p428
      // Predicated region
      $region87: #{tpu_custom_call.1} parent=5 // pred_check
        _
      $region88: #{tpu_custom_call.1} parent=5 // pred_check_branch
        %431 = sbr.rel (%p428) target = $region90
      $region89: #{tpu_custom_call.1} parent=5 // pred_region
        %s432 = ssub.s32 %s15, 1
        %s433 = sand.u32 %s176, 1
        %s434 = sand.u32 %s176, 1
        %s435 = smul.addr %s434, 128
        %s436 = scalar_lea.vmem [#allocation3], %s435
        // Predicated region
        $region91: #{tpu_custom_call.1} parent=89 // pred_check
          %p437 = pneg %p189
        $region92: #{tpu_custom_call.1} parent=89 // pred_check_branch
          %439 = sbr.rel (%p437) target = $region94
        $region93: #{tpu_custom_call.1} parent=89 // pred_region
          _
        $region94: #{tpu_custom_call.1} parent=89 // pred_fallthru
          _
        %s440 = smul.u32 32, %s24
        %p441 = scmp.lt.s32.totalorder %s440, 31
        %s442 = scalar_select %p441, %s440, 31
        %s443 = smul.addr %s442, 8
        %s444 = scalar_lea.vmem %s0, %s443
        %p445 = pneg %p53
        %p446 = pneg %p50
        %s447 = smul.u32 32, %s24
        %p448 = scmp.lt.s32.totalorder %s447, 31
        %s449 = scalar_select %p448, %s447, 31
        %s450 = smul.addr %s449, 4
        %s451 = scalar_lea.vmem %s1, %s450
        %p452 = pneg %p79
        %p453 = pneg %p76
        %p454 = pneg %p100
        %p455 = pneg %p97
        %p456 = pneg %p121
        %p457 = pneg %p118
        %p458 = pneg %p142
        %p459 = pneg %p139
        %p460 = pneg %p163
        %p461 = pneg %p160
        %s462 = sand.u32 %s176, 1
        %s463 = sand.u32 %s176, 1
        %s464 = smul.addr %s463, 128
        %s465 = scalar_lea.vmem [#allocation3], %s464
        %p466 = pneg %p189
        %p467 = pneg %p186
        %s468 = smul.u32 32, %s25
        %p469 = scmp.lt.s32.totalorder %s468, 63
        %s470 = scalar_select %p469, %s468, 63
        %s471 = smul.addr %s470, 8
        %s472 = scalar_lea.vmem %s7, %s471
        %p473 = pneg %p215
        %p474 = pneg %p212
        %p475 = pneg %p236
        %p476 = pneg %p233
        %p477 = pneg %p262
        %p478 = pneg %p259
        %s479 = smul.u32 32, %s24
        %p480 = scmp.lt.s32.totalorder %s479, 31
        %s481 = scalar_select %p480, %s479, 31
        %s482 = smul.addr %s481, 8
        %s483 = scalar_lea.vmem %s9, %s482
        %s484 = smul.u32 32, %s24
        %p485 = scmp.lt.s32.totalorder %s484, 31
        %s486 = scalar_select %p485, %s484, 31
        %s487 = smul.addr %s486, 8
        %s488 = scalar_lea.vmem %s0, %s487
        %s489 = smul.u32 32, %s24
        %s490 = smul.u32 32, %s24
        %p491 = scmp.lt.s32.totalorder %s490, 31
        %s492 = scalar_select %p491, %s490, 31
        %s493 = smul.addr %s492, 4
        %s494 = scalar_lea.vmem %s1, %s493
        %s495 = smul.u32 32, %s24
        %s496 = smul.u32 2, %s25
        %s497 = smul.u32 32, %s25
        %p498 = scmp.lt.s32.totalorder %s497, 63
        %s499 = scalar_select %p498, %s497, 63
        %s500 = smul.addr %s499, 8
        %s501 = scalar_lea.vmem %s7, %s500
        %s502 = smul.u32 32, %s25
        %s503 = smul.u32 32, %s24
        %p504 = scmp.lt.s32.totalorder %s503, 31
        %s505 = scalar_select %p504, %s503, 31
        %s506 = smul.addr %s505, 8
        %s507 = scalar_lea.vmem %s9, %s506
        %s508 = smul.u32 32, %s24
        %p509 = scmp.eq.s32.totalorder %s25, 0
        // Predicated region
        $region95: #{tpu_custom_call.1} parent=89 // pred_check
          %p510 = pneg %p509
        $region96: #{tpu_custom_call.1} parent=89 // pred_check_branch
          %512 = sbr.rel (%p510) target = $region98
        $region97: #{tpu_custom_call.1} parent=89 // pred_region
          %v513 = vld [vmem:[%s488] sm:$0xff]
          %v514 = vld [vmem:[%s488 + $0x8] sm:$0xff]
          %v515 = vld [vmem:[%s488 + $0x10] sm:$0xff]
          %v516 = vld [vmem:[%s488 + $0x18] sm:$0xff]
          %v517 = vld [vmem:[%s488 + $0x20] sm:$0xff]
          %v518 = vld [vmem:[%s488 + $0x28] sm:$0xff]
          %v519 = vld [vmem:[%s488 + $0x30] sm:$0xff]
          %v520 = vld [vmem:[%s488 + $0x38] sm:$0xff]
          %v521 = vld [vmem:[%s488 + $0x40] sm:$0xff]
          %v522 = vld [vmem:[%s488 + $0x48] sm:$0xff]
          %v523 = vld [vmem:[%s488 + $0x50] sm:$0xff]
          %v524 = vld [vmem:[%s488 + $0x58] sm:$0xff]
          %v525 = vld [vmem:[%s488 + $0x60] sm:$0xff]
          %v526 = vld [vmem:[%s488 + $0x68] sm:$0xff]
          %v527 = vld [vmem:[%s488 + $0x70] sm:$0xff]
          %v528 = vld [vmem:[%s488 + $0x78] sm:$0xff]
          %v529 = vld [vmem:[%s488 + $0x80] sm:$0xff]
          %v530 = vld [vmem:[%s488 + $0x88] sm:$0xff]
          %v531 = vld [vmem:[%s488 + $0x90] sm:$0xff]
          %v532 = vld [vmem:[%s488 + $0x98] sm:$0xff]
          %v533 = vld [vmem:[%s488 + $0xa0] sm:$0xff]
          %v534 = vld [vmem:[%s488 + $0xa8] sm:$0xff]
          %v535 = vld [vmem:[%s488 + $0xb0] sm:$0xff]
          %v536 = vld [vmem:[%s488 + $0xb8] sm:$0xff]
          %v537 = vld [vmem:[%s488 + $0xc0] sm:$0xff]
          %v538 = vld [vmem:[%s488 + $0xc8] sm:$0xff]
          %v539 = vld [vmem:[%s488 + $0xd0] sm:$0xff]
          %v540 = vld [vmem:[%s488 + $0xd8] sm:$0xff]
          %v541 = vld [vmem:[%s488 + $0xe0] sm:$0xff]
          %v542 = vld [vmem:[%s488 + $0xe8] sm:$0xff]
          %v543 = vld [vmem:[%s488 + $0xf0] sm:$0xff]
          %v544 = vld [vmem:[%s488 + $0xf8] sm:$0xff]
          %v545 = vld [vmem:[%s2] sm:$0xf]
          %v546 = vld [vmem:[%s3] sm:$0x1]
          %v548 = vperm.slane %v546, 0
          %vm550 = vcmask 31744
          %v552 = vsel %vm550, %v513, 0
          %v555 = vsel %vm550, %v514, 0
          %v558 = vsel %vm550, %v515, 0
          %v561 = vsel %vm550, %v516, 0
          %v564 = vsel %vm550, %v517, 0
          %v567 = vsel %vm550, %v518, 0
          %v570 = vsel %vm550, %v519, 0
          %v573 = vsel %vm550, %v520, 0
          %v576 = vsel %vm550, %v521, 0
          %v579 = vsel %vm550, %v522, 0
          %v582 = vsel %vm550, %v523, 0
          %v585 = vsel %vm550, %v524, 0
          %v588 = vsel %vm550, %v525, 0
          %v591 = vsel %vm550, %v526, 0
          %v594 = vsel %vm550, %v527, 0
          %v597 = vsel %vm550, %v528, 0
          %v600 = vsel %vm550, %v529, 0
          %v603 = vsel %vm550, %v530, 0
          %v606 = vsel %vm550, %v531, 0
          %v609 = vsel %vm550, %v532, 0
          %v612 = vsel %vm550, %v533, 0
          %v615 = vsel %vm550, %v534, 0
          %v618 = vsel %vm550, %v535, 0
          %v621 = vsel %vm550, %v536, 0
          %v624 = vsel %vm550, %v537, 0
          %v627 = vsel %vm550, %v538, 0
          %v630 = vsel %vm550, %v539, 0
          %v633 = vsel %vm550, %v540, 0
          %v636 = vsel %vm550, %v541, 0
          %v639 = vsel %vm550, %v542, 0
          %v642 = vsel %vm550, %v543, 0
          %v645 = vsel %vm550, %v544, 0
          %vm647 = vcmask 1043456
          %v649 = vsel %vm647, %v545, 0
          %651 = vmatpush.msra.mxu0 0.0
          %652 = vmatpush.msra.mxu0 0.0
          %653 = vmatpush.msra.mxu0 0.0
          %654 = vmatpush.msra.mxu0 0.0
          %655 = vmatpush.msra.mxu0 0.0
          %656 = vmatpush.msra.mxu0 0.0
          %657 = vmatpush.msra.mxu0 0.0
          %658 = vmatpush.msra.mxu0 0.0
          %659 = vmatpush.msra.mxu0 0.0
          %660 = vmatpush.msra.mxu0 0.0
          %661 = vmatpush.msra.mxu0 0.0
          %662 = vmatpush.msra.mxu0 0.0
          %663 = vmatpush.msra.mxu0 0.0
          %664 = vmatpush.msra.mxu0 0.0
          %665 = vmatpush.msra.mxu0 0.0
          %666 = vmatpush.msra.mxu0 %v649
          %667 = vmatmul.f32.gmra.mxu0 %v552
          %v668 = vpop.f32.mrf.mxu0
          %v669 = vadd.f32 %v548, %v668
          %670 = vmatmul.f32.gmra.mxu0 %v555
          %v671 = vpop.f32.mrf.mxu0
          %v672 = vadd.f32 %v548, %v671
          %673 = vmatmul.f32.gmra.mxu0 %v558
          %v674 = vpop.f32.mrf.mxu0
          %v675 = vadd.f32 %v548, %v674
          %676 = vmatmul.f32.gmra.mxu0 %v561
          %v677 = vpop.f32.mrf.mxu0
          %v678 = vadd.f32 %v548, %v677
          %679 = vmatmul.f32.gmra.mxu0 %v564
          %v680 = vpop.f32.mrf.mxu0
          %v681 = vadd.f32 %v548, %v680
          %682 = vmatmul.f32.gmra.mxu0 %v567
          %v683 = vpop.f32.mrf.mxu0
          %v684 = vadd.f32 %v548, %v683
          %685 = vmatmul.f32.gmra.mxu0 %v570
          %v686 = vpop.f32.mrf.mxu0
          %v687 = vadd.f32 %v548, %v686
          %688 = vmatmul.f32.gmra.mxu0 %v573
          %v689 = vpop.f32.mrf.mxu0
          %v690 = vadd.f32 %v548, %v689
          %691 = vmatmul.f32.gmra.mxu0 %v576
          %v692 = vpop.f32.mrf.mxu0
          %v693 = vadd.f32 %v548, %v692
          %694 = vmatmul.f32.gmra.mxu0 %v579
          %v695 = vpop.f32.mrf.mxu0
          %v696 = vadd.f32 %v548, %v695
          %697 = vmatmul.f32.gmra.mxu0 %v582
          %v698 = vpop.f32.mrf.mxu0
          %v699 = vadd.f32 %v548, %v698
          %700 = vmatmul.f32.gmra.mxu0 %v585
          %v701 = vpop.f32.mrf.mxu0
          %v702 = vadd.f32 %v548, %v701
          %703 = vmatmul.f32.gmra.mxu0 %v588
          %v704 = vpop.f32.mrf.mxu0
          %v705 = vadd.f32 %v548, %v704
          %706 = vmatmul.f32.gmra.mxu0 %v591
          %v707 = vpop.f32.mrf.mxu0
          %v708 = vadd.f32 %v548, %v707
          %709 = vmatmul.f32.gmra.mxu0 %v594
          %v710 = vpop.f32.mrf.mxu0
          %v711 = vadd.f32 %v548, %v710
          %712 = vmatmul.f32.gmra.mxu0 %v597
          %v713 = vpop.f32.mrf.mxu0
          %v714 = vadd.f32 %v548, %v713
          %715 = vmatmul.f32.gmra.mxu0 %v600
          %v716 = vpop.f32.mrf.mxu0
          %v717 = vadd.f32 %v548, %v716
          %718 = vmatmul.f32.gmra.mxu0 %v603
          %v719 = vpop.f32.mrf.mxu0
          %v720 = vadd.f32 %v548, %v719
          %721 = vmatmul.f32.gmra.mxu0 %v606
          %v722 = vpop.f32.mrf.mxu0
          %v723 = vadd.f32 %v548, %v722
          %724 = vmatmul.f32.gmra.mxu0 %v609
          %v725 = vpop.f32.mrf.mxu0
          %v726 = vadd.f32 %v548, %v725
          %727 = vmatmul.f32.gmra.mxu0 %v612
          %v728 = vpop.f32.mrf.mxu0
          %v729 = vadd.f32 %v548, %v728
          %730 = vmatmul.f32.gmra.mxu0 %v615
          %v731 = vpop.f32.mrf.mxu0
          %v732 = vadd.f32 %v548, %v731
          %733 = vmatmul.f32.gmra.mxu0 %v618
          %v734 = vpop.f32.mrf.mxu0
          %v735 = vadd.f32 %v548, %v734
          %736 = vmatmul.f32.gmra.mxu0 %v621
          %v737 = vpop.f32.mrf.mxu0
          %v738 = vadd.f32 %v548, %v737
          %739 = vmatmul.f32.gmra.mxu0 %v624
          %v740 = vpop.f32.mrf.mxu0
          %v741 = vadd.f32 %v548, %v740
          %742 = vmatmul.f32.gmra.mxu0 %v627
          %v743 = vpop.f32.mrf.mxu0
          %v744 = vadd.f32 %v548, %v743
          %745 = vmatmul.f32.gmra.mxu0 %v630
          %v746 = vpop.f32.mrf.mxu0
          %v747 = vadd.f32 %v548, %v746
          %748 = vmatmul.f32.gmra.mxu0 %v633
          %v749 = vpop.f32.mrf.mxu0
          %v750 = vadd.f32 %v548, %v749
          %751 = vmatmul.f32.gmra.mxu0 %v636
          %v752 = vpop.f32.mrf.mxu0
          %v753 = vadd.f32 %v548, %v752
          %754 = vmatmul.f32.gmra.mxu0 %v639
          %v755 = vpop.f32.mrf.mxu0
          %v756 = vadd.f32 %v548, %v755
          %757 = vmatmul.f32.gmra.mxu0 %v642
          %v758 = vpop.f32.mrf.mxu0
          %v759 = vadd.f32 %v548, %v758
          %760 = vmatmul.f32.gmra.mxu0 %v645
          %v761 = vpop.f32.mrf.mxu0
          %v762 = vadd.f32 %v548, %v761
          %763 = vdwg.mxu0
          %v764 = vmax.f32 %v669, 0.0
          %v765 = vmax.f32 %v672, 0.0
          %v766 = vmax.f32 %v675, 0.0
          %v767 = vmax.f32 %v678, 0.0
          %v768 = vmax.f32 %v681, 0.0
          %v769 = vmax.f32 %v684, 0.0
          %v770 = vmax.f32 %v687, 0.0
          %v771 = vmax.f32 %v690, 0.0
          %v772 = vmax.f32 %v693, 0.0
          %v773 = vmax.f32 %v696, 0.0
          %v774 = vmax.f32 %v699, 0.0
          %v775 = vmax.f32 %v702, 0.0
          %v776 = vmax.f32 %v705, 0.0
          %v777 = vmax.f32 %v708, 0.0
          %v778 = vmax.f32 %v711, 0.0
          %v779 = vmax.f32 %v714, 0.0
          %v780 = vmax.f32 %v717, 0.0
          %v781 = vmax.f32 %v720, 0.0
          %v782 = vmax.f32 %v723, 0.0
          %v783 = vmax.f32 %v726, 0.0
          %v784 = vmax.f32 %v729, 0.0
          %v785 = vmax.f32 %v732, 0.0
          %v786 = vmax.f32 %v735, 0.0
          %v787 = vmax.f32 %v738, 0.0
          %v788 = vmax.f32 %v741, 0.0
          %v789 = vmax.f32 %v744, 0.0
          %v790 = vmax.f32 %v747, 0.0
          %v791 = vmax.f32 %v750, 0.0
          %v792 = vmax.f32 %v753, 0.0
          %v793 = vmax.f32 %v756, 0.0
          %v794 = vmax.f32 %v759, 0.0
          %v795 = vmax.f32 %v762, 0.0
          %v796 = vld [vmem:[%s4] sm:$0xff]
          %v797 = vld [vmem:[%s4 + $0x8] sm:$0xff]
          %v798 = vld [vmem:[%s4 + $0x10] sm:$0xff]
          %v799 = vld [vmem:[%s4 + $0x18] sm:$0xff]
          %v800 = vld [vmem:[%s4 + $0x20] sm:$0xff]
          %v801 = vld [vmem:[%s4 + $0x28] sm:$0xff]
          %v802 = vld [vmem:[%s4 + $0x30] sm:$0xff]
          %v803 = vld [vmem:[%s4 + $0x38] sm:$0xff]
          %v804 = vld [vmem:[%s5] sm:$0x1]
          %v806 = vperm.slane %v804, 0
          %vm808 = vcmask 523264
          %v810 = vsel %vm808, %v764, 0
          %v813 = vsel %vm808, %v765, 0
          %v816 = vsel %vm808, %v766, 0
          %v819 = vsel %vm808, %v767, 0
          %v822 = vsel %vm808, %v768, 0
          %v825 = vsel %vm808, %v769, 0
          %v828 = vsel %vm808, %v770, 0
          %v831 = vsel %vm808, %v771, 0
          %v834 = vsel %vm808, %v772, 0
          %v837 = vsel %vm808, %v773, 0
          %v840 = vsel %vm808, %v774, 0
          %v843 = vsel %vm808, %v775, 0
          %v846 = vsel %vm808, %v776, 0
          %v849 = vsel %vm808, %v777, 0
          %v852 = vsel %vm808, %v778, 0
          %v855 = vsel %vm808, %v779, 0
          %v858 = vsel %vm808, %v780, 0
          %v861 = vsel %vm808, %v781, 0
          %v864 = vsel %vm808, %v782, 0
          %v867 = vsel %vm808, %v783, 0
          %v870 = vsel %vm808, %v784, 0
          %v873 = vsel %vm808, %v785, 0
          %v876 = vsel %vm808, %v786, 0
          %v879 = vsel %vm808, %v787, 0
          %v882 = vsel %vm808, %v788, 0
          %v885 = vsel %vm808, %v789, 0
          %v888 = vsel %vm808, %v790, 0
          %v891 = vsel %vm808, %v791, 0
          %v894 = vsel %vm808, %v792, 0
          %v897 = vsel %vm808, %v793, 0
          %v900 = vsel %vm808, %v794, 0
          %v903 = vsel %vm808, %v795, 0
          %905 = vmatpush.msra.mxu0 0.0
          %906 = vmatpush.msra.mxu0 0.0
          %907 = vmatpush.msra.mxu0 0.0
          %908 = vmatpush.msra.mxu0 0.0
          %909 = vmatpush.msra.mxu0 0.0
          %910 = vmatpush.msra.mxu0 0.0
          %911 = vmatpush.msra.mxu0 0.0
          %912 = vmatpush.msra.mxu0 0.0
          %913 = vmatpush.msra.mxu0 %v803
          %914 = vmatpush.msra.mxu0 %v802
          %915 = vmatpush.msra.mxu0 %v801
          %916 = vmatpush.msra.mxu0 %v800
          %917 = vmatpush.msra.mxu0 %v799
          %918 = vmatpush.msra.mxu0 %v798
          %919 = vmatpush.msra.mxu0 %v797
          %920 = vmatpush.msra.mxu0 %v796
          %921 = vmatmul.f32.gmra.mxu0 %v810
          %v922 = vpop.f32.mrf.mxu0
          %v923 = vadd.f32 %v806, %v922
          %924 = vmatmul.f32.gmra.mxu0 %v813
          %v925 = vpop.f32.mrf.mxu0
          %v926 = vadd.f32 %v806, %v925
          %927 = vmatmul.f32.gmra.mxu0 %v816
          %v928 = vpop.f32.mrf.mxu0
          %v929 = vadd.f32 %v806, %v928
          %930 = vmatmul.f32.gmra.mxu0 %v819
          %v931 = vpop.f32.mrf.mxu0
          %v932 = vadd.f32 %v806, %v931
          %933 = vmatmul.f32.gmra.mxu0 %v822
          %v934 = vpop.f32.mrf.mxu0
          %v935 = vadd.f32 %v806, %v934
          %936 = vmatmul.f32.gmra.mxu0 %v825
          %v937 = vpop.f32.mrf.mxu0
          %v938 = vadd.f32 %v806, %v937
          %939 = vmatmul.f32.gmra.mxu0 %v828
          %v940 = vpop.f32.mrf.mxu0
          %v941 = vadd.f32 %v806, %v940
          %942 = vmatmul.f32.gmra.mxu0 %v831
          %v943 = vpop.f32.mrf.mxu0
          %v944 = vadd.f32 %v806, %v943
          %945 = vmatmul.f32.gmra.mxu0 %v834
          %v946 = vpop.f32.mrf.mxu0
          %v947 = vadd.f32 %v806, %v946
          %948 = vmatmul.f32.gmra.mxu0 %v837
          %v949 = vpop.f32.mrf.mxu0
          %v950 = vadd.f32 %v806, %v949
          %951 = vmatmul.f32.gmra.mxu0 %v840
          %v952 = vpop.f32.mrf.mxu0
          %v953 = vadd.f32 %v806, %v952
          %954 = vmatmul.f32.gmra.mxu0 %v843
          %v955 = vpop.f32.mrf.mxu0
          %v956 = vadd.f32 %v806, %v955
          %957 = vmatmul.f32.gmra.mxu0 %v846
          %v958 = vpop.f32.mrf.mxu0
          %v959 = vadd.f32 %v806, %v958
          %960 = vmatmul.f32.gmra.mxu0 %v849
          %v961 = vpop.f32.mrf.mxu0
          %v962 = vadd.f32 %v806, %v961
          %963 = vmatmul.f32.gmra.mxu0 %v852
          %v964 = vpop.f32.mrf.mxu0
          %v965 = vadd.f32 %v806, %v964
          %966 = vmatmul.f32.gmra.mxu0 %v855
          %v967 = vpop.f32.mrf.mxu0
          %v968 = vadd.f32 %v806, %v967
          %969 = vmatmul.f32.gmra.mxu0 %v858
          %v970 = vpop.f32.mrf.mxu0
          %v971 = vadd.f32 %v806, %v970
          %972 = vmatmul.f32.gmra.mxu0 %v861
          %v973 = vpop.f32.mrf.mxu0
          %v974 = vadd.f32 %v806, %v973
          %975 = vmatmul.f32.gmra.mxu0 %v864
          %v976 = vpop.f32.mrf.mxu0
          %v977 = vadd.f32 %v806, %v976
          %978 = vmatmul.f32.gmra.mxu0 %v867
          %v979 = vpop.f32.mrf.mxu0
          %v980 = vadd.f32 %v806, %v979
          %981 = vmatmul.f32.gmra.mxu0 %v870
          %v982 = vpop.f32.mrf.mxu0
          %v983 = vadd.f32 %v806, %v982
          %984 = vmatmul.f32.gmra.mxu0 %v873
          %v985 = vpop.f32.mrf.mxu0
          %v986 = vadd.f32 %v806, %v985
          %987 = vmatmul.f32.gmra.mxu0 %v876
          %v988 = vpop.f32.mrf.mxu0
          %v989 = vadd.f32 %v806, %v988
          %990 = vmatmul.f32.gmra.mxu0 %v879
          %v991 = vpop.f32.mrf.mxu0
          %v992 = vadd.f32 %v806, %v991
          %993 = vmatmul.f32.gmra.mxu0 %v882
          %v994 = vpop.f32.mrf.mxu0
          %v995 = vadd.f32 %v806, %v994
          %996 = vmatmul.f32.gmra.mxu0 %v885
          %v997 = vpop.f32.mrf.mxu0
          %v998 = vadd.f32 %v806, %v997
          %999 = vmatmul.f32.gmra.mxu0 %v888
          %v1000 = vpop.f32.mrf.mxu0
          %v1001 = vadd.f32 %v806, %v1000
          %1002 = vmatmul.f32.gmra.mxu0 %v891
          %v1003 = vpop.f32.mrf.mxu0
          %v1004 = vadd.f32 %v806, %v1003
          %1005 = vmatmul.f32.gmra.mxu0 %v894
          %v1006 = vpop.f32.mrf.mxu0
          %v1007 = vadd.f32 %v806, %v1006
          %1008 = vmatmul.f32.gmra.mxu0 %v897
          %v1009 = vpop.f32.mrf.mxu0
          %v1010 = vadd.f32 %v806, %v1009
          %1011 = vmatmul.f32.gmra.mxu0 %v900
          %v1012 = vpop.f32.mrf.mxu0
          %v1013 = vadd.f32 %v806, %v1012
          %1014 = vmatmul.f32.gmra.mxu0 %v903
          %v1015 = vpop.f32.mrf.mxu0
          %v1016 = vadd.f32 %v806, %v1015
          %1017 = vdwg.mxu0
          %v1018 = vmax.f32 %v923, 0.0
          %v1019 = vmax.f32 %v926, 0.0
          %v1020 = vmax.f32 %v929, 0.0
          %v1021 = vmax.f32 %v932, 0.0
          %v1022 = vmax.f32 %v935, 0.0
          %v1023 = vmax.f32 %v938, 0.0
          %v1024 = vmax.f32 %v941, 0.0
          %v1025 = vmax.f32 %v944, 0.0
          %v1026 = vmax.f32 %v947, 0.0
          %v1027 = vmax.f32 %v950, 0.0
          %v1028 = vmax.f32 %v953, 0.0
          %v1029 = vmax.f32 %v956, 0.0
          %v1030 = vmax.f32 %v959, 0.0
          %v1031 = vmax.f32 %v962, 0.0
          %v1032 = vmax.f32 %v965, 0.0
          %v1033 = vmax.f32 %v968, 0.0
          %v1034 = vmax.f32 %v971, 0.0
          %v1035 = vmax.f32 %v974, 0.0
          %v1036 = vmax.f32 %v977, 0.0
          %v1037 = vmax.f32 %v980, 0.0
          %v1038 = vmax.f32 %v983, 0.0
          %v1039 = vmax.f32 %v986, 0.0
          %v1040 = vmax.f32 %v989, 0.0
          %v1041 = vmax.f32 %v992, 0.0
          %v1042 = vmax.f32 %v995, 0.0
          %v1043 = vmax.f32 %v998, 0.0
          %v1044 = vmax.f32 %v1001, 0.0
          %v1045 = vmax.f32 %v1004, 0.0
          %v1046 = vmax.f32 %v1007, 0.0
          %v1047 = vmax.f32 %v1010, 0.0
          %v1048 = vmax.f32 %v1013, 0.0
          %v1049 = vmax.f32 %v1016, 0.0
          %v1050 = vld [vmem:[%s494] sm:$0xf]
          %v1051 = vld [vmem:[%s494 + $0x4] sm:$0xf]
          %v1052 = vld [vmem:[%s494 + $0x8] sm:$0xf]
          %v1053 = vld [vmem:[%s494 + $0xc] sm:$0xf]
          %v1054 = vld [vmem:[%s494 + $0x10] sm:$0xf]
          %v1055 = vld [vmem:[%s494 + $0x14] sm:$0xf]
          %v1056 = vld [vmem:[%s494 + $0x18] sm:$0xf]
          %v1057 = vld [vmem:[%s494 + $0x1c] sm:$0xf]
          %v1058 = vld [vmem:[%s494 + $0x20] sm:$0xf]
          %v1059 = vld [vmem:[%s494 + $0x24] sm:$0xf]
          %v1060 = vld [vmem:[%s494 + $0x28] sm:$0xf]
          %v1061 = vld [vmem:[%s494 + $0x2c] sm:$0xf]
          %v1062 = vld [vmem:[%s494 + $0x30] sm:$0xf]
          %v1063 = vld [vmem:[%s494 + $0x34] sm:$0xf]
          %v1064 = vld [vmem:[%s494 + $0x38] sm:$0xf]
          %v1065 = vld [vmem:[%s494 + $0x3c] sm:$0xf]
          %v1066 = vld [vmem:[%s494 + $0x40] sm:$0xf]
          %v1067 = vld [vmem:[%s494 + $0x44] sm:$0xf]
          %v1068 = vld [vmem:[%s494 + $0x48] sm:$0xf]
          %v1069 = vld [vmem:[%s494 + $0x4c] sm:$0xf]
          %v1070 = vld [vmem:[%s494 + $0x50] sm:$0xf]
          %v1071 = vld [vmem:[%s494 + $0x54] sm:$0xf]
          %v1072 = vld [vmem:[%s494 + $0x58] sm:$0xf]
          %v1073 = vld [vmem:[%s494 + $0x5c] sm:$0xf]
          %v1074 = vld [vmem:[%s494 + $0x60] sm:$0xf]
          %v1075 = vld [vmem:[%s494 + $0x64] sm:$0xf]
          %v1076 = vld [vmem:[%s494 + $0x68] sm:$0xf]
          %v1077 = vld [vmem:[%s494 + $0x6c] sm:$0xf]
          %v1078 = vld [vmem:[%s494 + $0x70] sm:$0xf]
          %v1079 = vld [vmem:[%s494 + $0x74] sm:$0xf]
          %v1080 = vld [vmem:[%s494 + $0x78] sm:$0xf]
          %v1081 = vld [vmem:[%s494 + $0x7c] sm:$0xf]
          %v1082 = vpack.c.bf16 %v1018, %v1018
          %v1083 = vpack.c.bf16 %v1019, %v1019
          %v1084 = vpack.c.bf16 %v1020, %v1020
          %v1085 = vpack.c.bf16 %v1021, %v1021
          %v1086 = vpack.c.bf16 %v1022, %v1022
          %v1087 = vpack.c.bf16 %v1023, %v1023
          %v1088 = vpack.c.bf16 %v1024, %v1024
          %v1089 = vpack.c.bf16 %v1025, %v1025
          %v1090 = vpack.c.bf16 %v1026, %v1026
          %v1091 = vpack.c.bf16 %v1027, %v1027
          %v1092 = vpack.c.bf16 %v1028, %v1028
          %v1093 = vpack.c.bf16 %v1029, %v1029
          %v1094 = vpack.c.bf16 %v1030, %v1030
          %v1095 = vpack.c.bf16 %v1031, %v1031
          %v1096 = vpack.c.bf16 %v1032, %v1032
          %v1097 = vpack.c.bf16 %v1033, %v1033
          %v1098 = vpack.c.bf16 %v1034, %v1034
          %v1099 = vpack.c.bf16 %v1035, %v1035
          %v1100 = vpack.c.bf16 %v1036, %v1036
          %v1101 = vpack.c.bf16 %v1037, %v1037
          %v1102 = vpack.c.bf16 %v1038, %v1038
          %v1103 = vpack.c.bf16 %v1039, %v1039
          %v1104 = vpack.c.bf16 %v1040, %v1040
          %v1105 = vpack.c.bf16 %v1041, %v1041
          %v1106 = vpack.c.bf16 %v1042, %v1042
          %v1107 = vpack.c.bf16 %v1043, %v1043
          %v1108 = vpack.c.bf16 %v1044, %v1044
          %v1109 = vpack.c.bf16 %v1045, %v1045
          %v1110 = vpack.c.bf16 %v1046, %v1046
          %v1111 = vpack.c.bf16 %v1047, %v1047
          %v1112 = vpack.c.bf16 %v1048, %v1048
          %v1113 = vpack.c.bf16 %v1049, %v1049
          %v1114 = vunpack.c.l.bf16 %v1050
          %v1115 = vunpack.c.l.bf16 %v1051
          %v1116 = vunpack.c.l.bf16 %v1052
          %v1117 = vunpack.c.l.bf16 %v1053
          %v1118 = vunpack.c.l.bf16 %v1054
          %v1119 = vunpack.c.l.bf16 %v1055
          %v1120 = vunpack.c.l.bf16 %v1056
          %v1121 = vunpack.c.l.bf16 %v1057
          %v1122 = vunpack.c.l.bf16 %v1058
          %v1123 = vunpack.c.l.bf16 %v1059
          %v1124 = vunpack.c.l.bf16 %v1060
          %v1125 = vunpack.c.l.bf16 %v1061
          %v1126 = vunpack.c.l.bf16 %v1062
          %v1127 = vunpack.c.l.bf16 %v1063
          %v1128 = vunpack.c.l.bf16 %v1064
          %v1129 = vunpack.c.l.bf16 %v1065
          %v1130 = vunpack.c.l.bf16 %v1066
          %v1131 = vunpack.c.l.bf16 %v1067
          %v1132 = vunpack.c.l.bf16 %v1068
          %v1133 = vunpack.c.l.bf16 %v1069
          %v1134 = vunpack.c.l.bf16 %v1070
          %v1135 = vunpack.c.l.bf16 %v1071
          %v1136 = vunpack.c.l.bf16 %v1072
          %v1137 = vunpack.c.l.bf16 %v1073
          %v1138 = vunpack.c.l.bf16 %v1074
          %v1139 = vunpack.c.l.bf16 %v1075
          %v1140 = vunpack.c.l.bf16 %v1076
          %v1141 = vunpack.c.l.bf16 %v1077
          %v1142 = vunpack.c.l.bf16 %v1078
          %v1143 = vunpack.c.l.bf16 %v1079
          %v1144 = vunpack.c.l.bf16 %v1080
          %v1145 = vunpack.c.l.bf16 %v1081
          %v1146 = vunpack.c.l.bf16 %v1082
          %v1147 = vunpack.c.l.bf16 %v1083
          %v1148 = vunpack.c.l.bf16 %v1084
          %v1149 = vunpack.c.l.bf16 %v1085
          %v1150 = vunpack.c.l.bf16 %v1086
          %v1151 = vunpack.c.l.bf16 %v1087
          %v1152 = vunpack.c.l.bf16 %v1088
          %v1153 = vunpack.c.l.bf16 %v1089
          %v1154 = vunpack.c.l.bf16 %v1090
          %v1155 = vunpack.c.l.bf16 %v1091
          %v1156 = vunpack.c.l.bf16 %v1092
          %v1157 = vunpack.c.l.bf16 %v1093
          %v1158 = vunpack.c.l.bf16 %v1094
          %v1159 = vunpack.c.l.bf16 %v1095
          %v1160 = vunpack.c.l.bf16 %v1096
          %v1161 = vunpack.c.l.bf16 %v1097
          %v1162 = vunpack.c.l.bf16 %v1098
          %v1163 = vunpack.c.l.bf16 %v1099
          %v1164 = vunpack.c.l.bf16 %v1100
          %v1165 = vunpack.c.l.bf16 %v1101
          %v1166 = vunpack.c.l.bf16 %v1102
          %v1167 = vunpack.c.l.bf16 %v1103
          %v1168 = vunpack.c.l.bf16 %v1104
          %v1169 = vunpack.c.l.bf16 %v1105
          %v1170 = vunpack.c.l.bf16 %v1106
          %v1171 = vunpack.c.l.bf16 %v1107
          %v1172 = vunpack.c.l.bf16 %v1108
          %v1173 = vunpack.c.l.bf16 %v1109
          %v1174 = vunpack.c.l.bf16 %v1110
          %v1175 = vunpack.c.l.bf16 %v1111
          %v1176 = vunpack.c.l.bf16 %v1112
          %v1177 = vunpack.c.l.bf16 %v1113
          %v1178 = vadd.f32 %v1114, %v1146
          %v1179 = vadd.f32 %v1115, %v1147
          %v1180 = vadd.f32 %v1116, %v1148
          %v1181 = vadd.f32 %v1117, %v1149
          %v1182 = vadd.f32 %v1118, %v1150
          %v1183 = vadd.f32 %v1119, %v1151
          %v1184 = vadd.f32 %v1120, %v1152
          %v1185 = vadd.f32 %v1121, %v1153
          %v1186 = vadd.f32 %v1122, %v1154
          %v1187 = vadd.f32 %v1123, %v1155
          %v1188 = vadd.f32 %v1124, %v1156
          %v1189 = vadd.f32 %v1125, %v1157
          %v1190 = vadd.f32 %v1126, %v1158
          %v1191 = vadd.f32 %v1127, %v1159
          %v1192 = vadd.f32 %v1128, %v1160
          %v1193 = vadd.f32 %v1129, %v1161
          %v1194 = vadd.f32 %v1130, %v1162
          %v1195 = vadd.f32 %v1131, %v1163
          %v1196 = vadd.f32 %v1132, %v1164
          %v1197 = vadd.f32 %v1133, %v1165
          %v1198 = vadd.f32 %v1134, %v1166
          %v1199 = vadd.f32 %v1135, %v1167
          %v1200 = vadd.f32 %v1136, %v1168
          %v1201 = vadd.f32 %v1137, %v1169
          %v1202 = vadd.f32 %v1138, %v1170
          %v1203 = vadd.f32 %v1139, %v1171
          %v1204 = vadd.f32 %v1140, %v1172
          %v1205 = vadd.f32 %v1141, %v1173
          %v1206 = vadd.f32 %v1142, %v1174
          %v1207 = vadd.f32 %v1143, %v1175
          %v1208 = vadd.f32 %v1144, %v1176
          %v1209 = vadd.f32 %v1145, %v1177
          %v1210 = vpack.c.bf16 %v1178, %v1178
          %v1211 = vpack.c.bf16 %v1179, %v1179
          %v1212 = vpack.c.bf16 %v1180, %v1180
          %v1213 = vpack.c.bf16 %v1181, %v1181
          %v1214 = vpack.c.bf16 %v1182, %v1182
          %v1215 = vpack.c.bf16 %v1183, %v1183
          %v1216 = vpack.c.bf16 %v1184, %v1184
          %v1217 = vpack.c.bf16 %v1185, %v1185
          %v1218 = vpack.c.bf16 %v1186, %v1186
          %v1219 = vpack.c.bf16 %v1187, %v1187
          %v1220 = vpack.c.bf16 %v1188, %v1188
          %v1221 = vpack.c.bf16 %v1189, %v1189
          %v1222 = vpack.c.bf16 %v1190, %v1190
          %v1223 = vpack.c.bf16 %v1191, %v1191
          %v1224 = vpack.c.bf16 %v1192, %v1192
          %v1225 = vpack.c.bf16 %v1193, %v1193
          %v1226 = vpack.c.bf16 %v1194, %v1194
          %v1227 = vpack.c.bf16 %v1195, %v1195
          %v1228 = vpack.c.bf16 %v1196, %v1196
          %v1229 = vpack.c.bf16 %v1197, %v1197
          %v1230 = vpack.c.bf16 %v1198, %v1198
          %v1231 = vpack.c.bf16 %v1199, %v1199
          %v1232 = vpack.c.bf16 %v1200, %v1200
          %v1233 = vpack.c.bf16 %v1201, %v1201
          %v1234 = vpack.c.bf16 %v1202, %v1202
          %v1235 = vpack.c.bf16 %v1203, %v1203
          %v1236 = vpack.c.bf16 %v1204, %v1204
          %v1237 = vpack.c.bf16 %v1205, %v1205
          %v1238 = vpack.c.bf16 %v1206, %v1206
          %v1239 = vpack.c.bf16 %v1207, %v1207
          %v1240 = vpack.c.bf16 %v1208, %v1208
          %v1241 = vpack.c.bf16 %v1209, %v1209
          %1242 = vst [vmem:[#allocation2] sm:$0xf] %v1210
          %1243 = vst [vmem:[#allocation2 + $0x4] sm:$0xf] %v1211
          %1244 = vst [vmem:[#allocation2 + $0x8] sm:$0xf] %v1212
          %1245 = vst [vmem:[#allocation2 + $0xc] sm:$0xf] %v1213
          %1246 = vst [vmem:[#allocation2 + $0x10] sm:$0xf] %v1214
          %1247 = vst [vmem:[#allocation2 + $0x14] sm:$0xf] %v1215
          %1248 = vst [vmem:[#allocation2 + $0x18] sm:$0xf] %v1216
          %1249 = vst [vmem:[#allocation2 + $0x1c] sm:$0xf] %v1217
          %1250 = vst [vmem:[#allocation2 + $0x20] sm:$0xf] %v1218
          %1251 = vst [vmem:[#allocation2 + $0x24] sm:$0xf] %v1219
          %1252 = vst [vmem:[#allocation2 + $0x28] sm:$0xf] %v1220
          %1253 = vst [vmem:[#allocation2 + $0x2c] sm:$0xf] %v1221
          %1254 = vst [vmem:[#allocation2 + $0x30] sm:$0xf] %v1222
          %1255 = vst [vmem:[#allocation2 + $0x34] sm:$0xf] %v1223
          %1256 = vst [vmem:[#allocation2 + $0x38] sm:$0xf] %v1224
          %1257 = vst [vmem:[#allocation2 + $0x3c] sm:$0xf] %v1225
          %1258 = vst [vmem:[#allocation2 + $0x40] sm:$0xf] %v1226
          %1259 = vst [vmem:[#allocation2 + $0x44] sm:$0xf] %v1227
          %1260 = vst [vmem:[#allocation2 + $0x48] sm:$0xf] %v1228
          %1261 = vst [vmem:[#allocation2 + $0x4c] sm:$0xf] %v1229
          %1262 = vst [vmem:[#allocation2 + $0x50] sm:$0xf] %v1230
          %1263 = vst [vmem:[#allocation2 + $0x54] sm:$0xf] %v1231
          %1264 = vst [vmem:[#allocation2 + $0x58] sm:$0xf] %v1232
          %1265 = vst [vmem:[#allocation2 + $0x5c] sm:$0xf] %v1233
          %1266 = vst [vmem:[#allocation2 + $0x60] sm:$0xf] %v1234
          %1267 = vst [vmem:[#allocation2 + $0x64] sm:$0xf] %v1235
          %1268 = vst [vmem:[#allocation2 + $0x68] sm:$0xf] %v1236
          %1269 = vst [vmem:[#allocation2 + $0x6c] sm:$0xf] %v1237
          %1270 = vst [vmem:[#allocation2 + $0x70] sm:$0xf] %v1238
          %1271 = vst [vmem:[#allocation2 + $0x74] sm:$0xf] %v1239
          %1272 = vst [vmem:[#allocation2 + $0x78] sm:$0xf] %v1240
          %1273 = vst [vmem:[#allocation2 + $0x7c] sm:$0xf] %v1241
          %vm1274 = vcmask 261120
          %1275 = vst.msk [vmem:[%s507] sm:$0xff] %vm1274, 0.0
          %1276 = vst.msk [vmem:[%s507 + $0x8] sm:$0xff] %vm1274, 0.0
          %1277 = vst.msk [vmem:[%s507 + $0x10] sm:$0xff] %vm1274, 0.0
          %1278 = vst.msk [vmem:[%s507 + $0x18] sm:$0xff] %vm1274, 0.0
          %1279 = vst.msk [vmem:[%s507 + $0x20] sm:$0xff] %vm1274, 0.0
          %1280 = vst.msk [vmem:[%s507 + $0x28] sm:$0xff] %vm1274, 0.0
          %1281 = vst.msk [vmem:[%s507 + $0x30] sm:$0xff] %vm1274, 0.0
          %1282 = vst.msk [vmem:[%s507 + $0x38] sm:$0xff] %vm1274, 0.0
          %1283 = vst.msk [vmem:[%s507 + $0x40] sm:$0xff] %vm1274, 0.0
          %1284 = vst.msk [vmem:[%s507 + $0x48] sm:$0xff] %vm1274, 0.0
          %1285 = vst.msk [vmem:[%s507 + $0x50] sm:$0xff] %vm1274, 0.0
          %1286 = vst.msk [vmem:[%s507 + $0x58] sm:$0xff] %vm1274, 0.0
          %1287 = vst.msk [vmem:[%s507 + $0x60] sm:$0xff] %vm1274, 0.0
          %1288 = vst.msk [vmem:[%s507 + $0x68] sm:$0xff] %vm1274, 0.0
          %1289 = vst.msk [vmem:[%s507 + $0x70] sm:$0xff] %vm1274, 0.0
          %1290 = vst.msk [vmem:[%s507 + $0x78] sm:$0xff] %vm1274, 0.0
          %1291 = vst.msk [vmem:[%s507 + $0x80] sm:$0xff] %vm1274, 0.0
          %1292 = vst.msk [vmem:[%s507 + $0x88] sm:$0xff] %vm1274, 0.0
          %1293 = vst.msk [vmem:[%s507 + $0x90] sm:$0xff] %vm1274, 0.0
          %1294 = vst.msk [vmem:[%s507 + $0x98] sm:$0xff] %vm1274, 0.0
          %1295 = vst.msk [vmem:[%s507 + $0xa0] sm:$0xff] %vm1274, 0.0
          %1296 = vst.msk [vmem:[%s507 + $0xa8] sm:$0xff] %vm1274, 0.0
          %1297 = vst.msk [vmem:[%s507 + $0xb0] sm:$0xff] %vm1274, 0.0
          %1298 = vst.msk [vmem:[%s507 + $0xb8] sm:$0xff] %vm1274, 0.0
          %1299 = vst.msk [vmem:[%s507 + $0xc0] sm:$0xff] %vm1274, 0.0
          %1300 = vst.msk [vmem:[%s507 + $0xc8] sm:$0xff] %vm1274, 0.0
          %1301 = vst.msk [vmem:[%s507 + $0xd0] sm:$0xff] %vm1274, 0.0
          %1302 = vst.msk [vmem:[%s507 + $0xd8] sm:$0xff] %vm1274, 0.0
          %1303 = vst.msk [vmem:[%s507 + $0xe0] sm:$0xff] %vm1274, 0.0
          %1304 = vst.msk [vmem:[%s507 + $0xe8] sm:$0xff] %vm1274, 0.0
          %1305 = vst.msk [vmem:[%s507 + $0xf0] sm:$0xff] %vm1274, 0.0
          %1306 = vst.msk [vmem:[%s507 + $0xf8] sm:$0xff] %vm1274, 0.0
        $region98: #{tpu_custom_call.1} parent=89 // pred_fallthru
          _
        %v1307 = vld [vmem:[#allocation2] sm:$0xf]
        %v1308 = vld [vmem:[#allocation2 + $0x4] sm:$0xf]
        %v1309 = vld [vmem:[#allocation2 + $0x8] sm:$0xf]
        %v1310 = vld [vmem:[#allocation2 + $0xc] sm:$0xf]
        %v1311 = vld [vmem:[#allocation2 + $0x10] sm:$0xf]
        %v1312 = vld [vmem:[#allocation2 + $0x14] sm:$0xf]
        %v1313 = vld [vmem:[#allocation2 + $0x18] sm:$0xf]
        %v1314 = vld [vmem:[#allocation2 + $0x1c] sm:$0xf]
        %v1315 = vld [vmem:[#allocation2 + $0x20] sm:$0xf]
        %v1316 = vld [vmem:[#allocation2 + $0x24] sm:$0xf]
        %v1317 = vld [vmem:[#allocation2 + $0x28] sm:$0xf]
        %v1318 = vld [vmem:[#allocation2 + $0x2c] sm:$0xf]
        %v1319 = vld [vmem:[#allocation2 + $0x30] sm:$0xf]
        %v1320 = vld [vmem:[#allocation2 + $0x34] sm:$0xf]
        %v1321 = vld [vmem:[#allocation2 + $0x38] sm:$0xf]
        %v1322 = vld [vmem:[#allocation2 + $0x3c] sm:$0xf]
        %v1323 = vld [vmem:[#allocation2 + $0x40] sm:$0xf]
        %v1324 = vld [vmem:[#allocation2 + $0x44] sm:$0xf]
        %v1325 = vld [vmem:[#allocation2 + $0x48] sm:$0xf]
        %v1326 = vld [vmem:[#allocation2 + $0x4c] sm:$0xf]
        %v1327 = vld [vmem:[#allocation2 + $0x50] sm:$0xf]
        %v1328 = vld [vmem:[#allocation2 + $0x54] sm:$0xf]
        %v1329 = vld [vmem:[#allocation2 + $0x58] sm:$0xf]
        %v1330 = vld [vmem:[#allocation2 + $0x5c] sm:$0xf]
        %v1331 = vld [vmem:[#allocation2 + $0x60] sm:$0xf]
        %v1332 = vld [vmem:[#allocation2 + $0x64] sm:$0xf]
        %v1333 = vld [vmem:[#allocation2 + $0x68] sm:$0xf]
        %v1334 = vld [vmem:[#allocation2 + $0x6c] sm:$0xf]
        %v1335 = vld [vmem:[#allocation2 + $0x70] sm:$0xf]
        %v1336 = vld [vmem:[#allocation2 + $0x74] sm:$0xf]
        %v1337 = vld [vmem:[#allocation2 + $0x78] sm:$0xf]
        %v1338 = vld [vmem:[#allocation2 + $0x7c] sm:$0xf]
        %v1339 = vld [vmem:[%s436] sm:$0xff]
        %v1340 = vld [vmem:[%s436 + $0x8] sm:$0xff]
        %v1341 = vld [vmem:[%s436 + $0x10] sm:$0xff]
        %v1342 = vld [vmem:[%s436 + $0x18] sm:$0xff]
        %v1343 = vld [vmem:[%s436 + $0x20] sm:$0xff]
        %v1344 = vld [vmem:[%s436 + $0x28] sm:$0xff]
        %v1345 = vld [vmem:[%s436 + $0x30] sm:$0xff]
        %v1346 = vld [vmem:[%s436 + $0x38] sm:$0xff]
        %v1347 = vld [vmem:[%s436 + $0x40] sm:$0xff]
        %v1348 = vld [vmem:[%s436 + $0x48] sm:$0xff]
        %v1349 = vld [vmem:[%s436 + $0x50] sm:$0xff]
        %v1350 = vld [vmem:[%s436 + $0x58] sm:$0xff]
        %v1351 = vld [vmem:[%s436 + $0x60] sm:$0xff]
        %v1352 = vld [vmem:[%s436 + $0x68] sm:$0xff]
        %v1353 = vld [vmem:[%s436 + $0x70] sm:$0xff]
        %v1354 = vld [vmem:[%s436 + $0x78] sm:$0xff]
        %v1387 = vunpack.c.l.b16 %v1307
        %v1388 = vunpack.c.l.b16 %v1308
        %v1389 = vunpack.c.l.b16 %v1309
        %v1390 = vunpack.c.l.b16 %v1310
        %v1391 = vunpack.c.l.b16 %v1311
        %v1392 = vunpack.c.l.b16 %v1312
        %v1393 = vunpack.c.l.b16 %v1313
        %v1394 = vunpack.c.l.b16 %v1314
        %v1395 = vunpack.c.l.b16 %v1315
        %v1396 = vunpack.c.l.b16 %v1316
        %v1397 = vunpack.c.l.b16 %v1317
        %v1398 = vunpack.c.l.b16 %v1318
        %v1399 = vunpack.c.l.b16 %v1319
        %v1400 = vunpack.c.l.b16 %v1320
        %v1401 = vunpack.c.l.b16 %v1321
        %v1402 = vunpack.c.l.b16 %v1322
        %v1403 = vunpack.c.l.b16 %v1323
        %v1404 = vunpack.c.l.b16 %v1324
        %v1405 = vunpack.c.l.b16 %v1325
        %v1406 = vunpack.c.l.b16 %v1326
        %v1407 = vunpack.c.l.b16 %v1327
        %v1408 = vunpack.c.l.b16 %v1328
        %v1409 = vunpack.c.l.b16 %v1329
        %v1410 = vunpack.c.l.b16 %v1330
        %v1411 = vunpack.c.l.b16 %v1331
        %v1412 = vunpack.c.l.b16 %v1332
        %v1413 = vunpack.c.l.b16 %v1333
        %v1414 = vunpack.c.l.b16 %v1334
        %v1415 = vunpack.c.l.b16 %v1335
        %v1416 = vunpack.c.l.b16 %v1336
        %v1417 = vunpack.c.l.b16 %v1337
        %v1418 = vunpack.c.l.b16 %v1338
        %v1419 = vpack.c.b16 %v1388, %v1387
        %v1420 = vpack.c.b16 %v1390, %v1389
        %v1421 = vpack.c.b16 %v1392, %v1391
        %v1422 = vpack.c.b16 %v1394, %v1393
        %v1423 = vpack.c.b16 %v1396, %v1395
        %v1424 = vpack.c.b16 %v1398, %v1397
        %v1425 = vpack.c.b16 %v1400, %v1399
        %v1426 = vpack.c.b16 %v1402, %v1401
        %v1427 = vpack.c.b16 %v1404, %v1403
        %v1428 = vpack.c.b16 %v1406, %v1405
        %v1429 = vpack.c.b16 %v1408, %v1407
        %v1430 = vpack.c.b16 %v1410, %v1409
        %v1431 = vpack.c.b16 %v1412, %v1411
        %v1432 = vpack.c.b16 %v1414, %v1413
        %v1433 = vpack.c.b16 %v1416, %v1415
        %v1434 = vpack.c.b16 %v1418, %v1417
        %v1467 = vunpack.c.l.b16 %v1339
        %v1468 = vunpack.c.h.b16 %v1339
        %v1469 = vunpack.c.l.b16 %v1340
        %v1470 = vunpack.c.h.b16 %v1340
        %v1471 = vunpack.c.l.b16 %v1341
        %v1472 = vunpack.c.h.b16 %v1341
        %v1473 = vunpack.c.l.b16 %v1342
        %v1474 = vunpack.c.h.b16 %v1342
        %v1475 = vunpack.c.l.b16 %v1343
        %v1476 = vunpack.c.h.b16 %v1343
        %v1477 = vunpack.c.l.b16 %v1344
        %v1478 = vunpack.c.h.b16 %v1344
        %v1479 = vunpack.c.l.b16 %v1345
        %v1480 = vunpack.c.h.b16 %v1345
        %v1481 = vunpack.c.l.b16 %v1346
        %v1482 = vunpack.c.h.b16 %v1346
        %v1483 = vunpack.c.l.b16 %v1347
        %v1484 = vunpack.c.h.b16 %v1347
        %v1485 = vunpack.c.l.b16 %v1348
        %v1486 = vunpack.c.h.b16 %v1348
        %v1487 = vunpack.c.l.b16 %v1349
        %v1488 = vunpack.c.h.b16 %v1349
        %v1489 = vunpack.c.l.b16 %v1350
        %v1490 = vunpack.c.h.b16 %v1350
        %v1491 = vunpack.c.l.b16 %v1351
        %v1492 = vunpack.c.h.b16 %v1351
        %v1493 = vunpack.c.l.b16 %v1352
        %v1494 = vunpack.c.h.b16 %v1352
        %v1495 = vunpack.c.l.b16 %v1353
        %v1496 = vunpack.c.h.b16 %v1353
        %v1497 = vunpack.c.l.b16 %v1354
        %v1498 = vunpack.c.h.b16 %v1354
        %v1499 = vpack.c.b16 %v1469, %v1467
        %v1500 = vpack.c.b16 %v1470, %v1468
        %v1501 = vpack.c.b16 %v1473, %v1471
        %v1502 = vpack.c.b16 %v1474, %v1472
        %v1503 = vpack.c.b16 %v1477, %v1475
        %v1504 = vpack.c.b16 %v1478, %v1476
        %v1505 = vpack.c.b16 %v1481, %v1479
        %v1506 = vpack.c.b16 %v1482, %v1480
        %v1507 = vpack.c.b16 %v1485, %v1483
        %v1508 = vpack.c.b16 %v1486, %v1484
        %v1509 = vpack.c.b16 %v1489, %v1487
        %v1510 = vpack.c.b16 %v1490, %v1488
        %v1511 = vpack.c.b16 %v1493, %v1491
        %v1512 = vpack.c.b16 %v1494, %v1492
        %v1513 = vpack.c.b16 %v1497, %v1495
        %v1514 = vpack.c.b16 %v1498, %v1496
        %1531 = vmatpush.bf16.msra.mxu0 %v1513
        %1532 = vmatpush.bf16.msra.mxu0 %v1511
        %1533 = vmatpush.bf16.msra.mxu0 %v1509
        %1534 = vmatpush.bf16.msra.mxu0 %v1507
        %1535 = vmatpush.bf16.msra.mxu0 %v1505
        %1536 = vmatpush.bf16.msra.mxu0 %v1503
        %1537 = vmatpush.bf16.msra.mxu0 %v1501
        %1538 = vmatpush.bf16.msra.mxu0 %v1499
        %1539 = vmatmul.bf16.gmra.mxu0 %v1419
        %v1540 = vpop.f32.mrf.mxu0
        %v1541 = vadd.f32 0.0, %v1540
        %v1542 = vpop.f32.mrf.mxu0
        %v1543 = vadd.f32 0.0, %v1542
        %1544 = vmatmul.bf16.gmra.mxu0 %v1420
        %v1545 = vpop.f32.mrf.mxu0
        %v1546 = vadd.f32 0.0, %v1545
        %v1547 = vpop.f32.mrf.mxu0
        %v1548 = vadd.f32 0.0, %v1547
        %1549 = vmatmul.bf16.gmra.mxu0 %v1421
        %v1550 = vpop.f32.mrf.mxu0
        %v1551 = vadd.f32 0.0, %v1550
        %v1552 = vpop.f32.mrf.mxu0
        %v1553 = vadd.f32 0.0, %v1552
        %1554 = vmatmul.bf16.gmra.mxu0 %v1422
        %v1555 = vpop.f32.mrf.mxu0
        %v1556 = vadd.f32 0.0, %v1555
        %v1557 = vpop.f32.mrf.mxu0
        %v1558 = vadd.f32 0.0, %v1557
        %1559 = vmatmul.bf16.gmra.mxu0 %v1423
        %v1560 = vpop.f32.mrf.mxu0
        %v1561 = vadd.f32 0.0, %v1560
        %v1562 = vpop.f32.mrf.mxu0
        %v1563 = vadd.f32 0.0, %v1562
        %1564 = vmatmul.bf16.gmra.mxu0 %v1424
        %v1565 = vpop.f32.mrf.mxu0
        %v1566 = vadd.f32 0.0, %v1565
        %v1567 = vpop.f32.mrf.mxu0
        %v1568 = vadd.f32 0.0, %v1567
        %1569 = vmatmul.bf16.gmra.mxu0 %v1425
        %v1570 = vpop.f32.mrf.mxu0
        %v1571 = vadd.f32 0.0, %v1570
        %v1572 = vpop.f32.mrf.mxu0
        %v1573 = vadd.f32 0.0, %v1572
        %1574 = vmatmul.bf16.gmra.mxu0 %v1426
        %v1575 = vpop.f32.mrf.mxu0
        %v1576 = vadd.f32 0.0, %v1575
        %v1577 = vpop.f32.mrf.mxu0
        %v1578 = vadd.f32 0.0, %v1577
        %1579 = vmatmul.bf16.gmra.mxu0 %v1427
        %v1580 = vpop.f32.mrf.mxu0
        %v1581 = vadd.f32 0.0, %v1580
        %v1582 = vpop.f32.mrf.mxu0
        %v1583 = vadd.f32 0.0, %v1582
        %1584 = vmatmul.bf16.gmra.mxu0 %v1428
        %v1585 = vpop.f32.mrf.mxu0
        %v1586 = vadd.f32 0.0, %v1585
        %v1587 = vpop.f32.mrf.mxu0
        %v1588 = vadd.f32 0.0, %v1587
        %1589 = vmatmul.bf16.gmra.mxu0 %v1429
        %v1590 = vpop.f32.mrf.mxu0
        %v1591 = vadd.f32 0.0, %v1590
        %v1592 = vpop.f32.mrf.mxu0
        %v1593 = vadd.f32 0.0, %v1592
        %1594 = vmatmul.bf16.gmra.mxu0 %v1430
        %v1595 = vpop.f32.mrf.mxu0
        %v1596 = vadd.f32 0.0, %v1595
        %v1597 = vpop.f32.mrf.mxu0
        %v1598 = vadd.f32 0.0, %v1597
        %1599 = vmatmul.bf16.gmra.mxu0 %v1431
        %v1600 = vpop.f32.mrf.mxu0
        %v1601 = vadd.f32 0.0, %v1600
        %v1602 = vpop.f32.mrf.mxu0
        %v1603 = vadd.f32 0.0, %v1602
        %1604 = vmatmul.bf16.gmra.mxu0 %v1432
        %v1605 = vpop.f32.mrf.mxu0
        %v1606 = vadd.f32 0.0, %v1605
        %v1607 = vpop.f32.mrf.mxu0
        %v1608 = vadd.f32 0.0, %v1607
        %1609 = vmatmul.bf16.gmra.mxu0 %v1433
        %v1610 = vpop.f32.mrf.mxu0
        %v1611 = vadd.f32 0.0, %v1610
        %v1612 = vpop.f32.mrf.mxu0
        %v1613 = vadd.f32 0.0, %v1612
        %1614 = vmatmul.bf16.gmra.mxu0 %v1434
        %v1615 = vpop.f32.mrf.mxu0
        %v1616 = vadd.f32 0.0, %v1615
        %v1617 = vpop.f32.mrf.mxu0
        %v1618 = vadd.f32 0.0, %v1617
        %1619 = vdwg.mxu0
        %1620 = vmatpush.bf16.msra.mxu0 %v1514
        %1621 = vmatpush.bf16.msra.mxu0 %v1512
        %1622 = vmatpush.bf16.msra.mxu0 %v1510
        %1623 = vmatpush.bf16.msra.mxu0 %v1508
        %1624 = vmatpush.bf16.msra.mxu0 %v1506
        %1625 = vmatpush.bf16.msra.mxu0 %v1504
        %1626 = vmatpush.bf16.msra.mxu0 %v1502
        %1627 = vmatpush.bf16.msra.mxu0 %v1500
        %1628 = vmatmul.bf16.gmra.mxu0 %v1419
        %v1629 = vpop.f32.mrf.mxu0
        %v1630 = vadd.f32 0.0, %v1629
        %v1631 = vpop.f32.mrf.mxu0
        %v1632 = vadd.f32 0.0, %v1631
        %1633 = vmatmul.bf16.gmra.mxu0 %v1420
        %v1634 = vpop.f32.mrf.mxu0
        %v1635 = vadd.f32 0.0, %v1634
        %v1636 = vpop.f32.mrf.mxu0
        %v1637 = vadd.f32 0.0, %v1636
        %1638 = vmatmul.bf16.gmra.mxu0 %v1421
        %v1639 = vpop.f32.mrf.mxu0
        %v1640 = vadd.f32 0.0, %v1639
        %v1641 = vpop.f32.mrf.mxu0
        %v1642 = vadd.f32 0.0, %v1641
        %1643 = vmatmul.bf16.gmra.mxu0 %v1422
        %v1644 = vpop.f32.mrf.mxu0
        %v1645 = vadd.f32 0.0, %v1644
        %v1646 = vpop.f32.mrf.mxu0
        %v1647 = vadd.f32 0.0, %v1646
        %1648 = vmatmul.bf16.gmra.mxu0 %v1423
        %v1649 = vpop.f32.mrf.mxu0
        %v1650 = vadd.f32 0.0, %v1649
        %v1651 = vpop.f32.mrf.mxu0
        %v1652 = vadd.f32 0.0, %v1651
        %1653 = vmatmul.bf16.gmra.mxu0 %v1424
        %v1654 = vpop.f32.mrf.mxu0
        %v1655 = vadd.f32 0.0, %v1654
        %v1656 = vpop.f32.mrf.mxu0
        %v1657 = vadd.f32 0.0, %v1656
        %1658 = vmatmul.bf16.gmra.mxu0 %v1425
        %v1659 = vpop.f32.mrf.mxu0
        %v1660 = vadd.f32 0.0, %v1659
        %v1661 = vpop.f32.mrf.mxu0
        %v1662 = vadd.f32 0.0, %v1661
        %1663 = vmatmul.bf16.gmra.mxu0 %v1426
        %v1664 = vpop.f32.mrf.mxu0
        %v1665 = vadd.f32 0.0, %v1664
        %v1666 = vpop.f32.mrf.mxu0
        %v1667 = vadd.f32 0.0, %v1666
        %1668 = vmatmul.bf16.gmra.mxu0 %v1427
        %v1669 = vpop.f32.mrf.mxu0
        %v1670 = vadd.f32 0.0, %v1669
        %v1671 = vpop.f32.mrf.mxu0
        %v1672 = vadd.f32 0.0, %v1671
        %1673 = vmatmul.bf16.gmra.mxu0 %v1428
        %v1674 = vpop.f32.mrf.mxu0
        %v1675 = vadd.f32 0.0, %v1674
        %v1676 = vpop.f32.mrf.mxu0
        %v1677 = vadd.f32 0.0, %v1676
        %1678 = vmatmul.bf16.gmra.mxu0 %v1429
        %v1679 = vpop.f32.mrf.mxu0
        %v1680 = vadd.f32 0.0, %v1679
        %v1681 = vpop.f32.mrf.mxu0
        %v1682 = vadd.f32 0.0, %v1681
        %1683 = vmatmul.bf16.gmra.mxu0 %v1430
        %v1684 = vpop.f32.mrf.mxu0
        %v1685 = vadd.f32 0.0, %v1684
        %v1686 = vpop.f32.mrf.mxu0
        %v1687 = vadd.f32 0.0, %v1686
        %1688 = vmatmul.bf16.gmra.mxu0 %v1431
        %v1689 = vpop.f32.mrf.mxu0
        %v1690 = vadd.f32 0.0, %v1689
        %v1691 = vpop.f32.mrf.mxu0
        %v1692 = vadd.f32 0.0, %v1691
        %1693 = vmatmul.bf16.gmra.mxu0 %v1432
        %v1694 = vpop.f32.mrf.mxu0
        %v1695 = vadd.f32 0.0, %v1694
        %v1696 = vpop.f32.mrf.mxu0
        %v1697 = vadd.f32 0.0, %v1696
        %1698 = vmatmul.bf16.gmra.mxu0 %v1433
        %v1699 = vpop.f32.mrf.mxu0
        %v1700 = vadd.f32 0.0, %v1699
        %v1701 = vpop.f32.mrf.mxu0
        %v1702 = vadd.f32 0.0, %v1701
        %1703 = vmatmul.bf16.gmra.mxu0 %v1434
        %v1704 = vpop.f32.mrf.mxu0
        %v1705 = vadd.f32 0.0, %v1704
        %v1706 = vpop.f32.mrf.mxu0
        %v1707 = vadd.f32 0.0, %v1706
        %1708 = vdwg.mxu0
        %v1709 = vmax.f32 %v1541, 0.0
        %v1710 = vmax.f32 %v1630, 0.0
        %v1711 = vmax.f32 %v1543, 0.0
        %v1712 = vmax.f32 %v1632, 0.0
        %v1713 = vmax.f32 %v1546, 0.0
        %v1714 = vmax.f32 %v1635, 0.0
        %v1715 = vmax.f32 %v1548, 0.0
        %v1716 = vmax.f32 %v1637, 0.0
        %v1717 = vmax.f32 %v1551, 0.0
        %v1718 = vmax.f32 %v1640, 0.0
        %v1719 = vmax.f32 %v1553, 0.0
        %v1720 = vmax.f32 %v1642, 0.0
        %v1721 = vmax.f32 %v1556, 0.0
        %v1722 = vmax.f32 %v1645, 0.0
        %v1723 = vmax.f32 %v1558, 0.0
        %v1724 = vmax.f32 %v1647, 0.0
        %v1725 = vmax.f32 %v1561, 0.0
        %v1726 = vmax.f32 %v1650, 0.0
        %v1727 = vmax.f32 %v1563, 0.0
        %v1728 = vmax.f32 %v1652, 0.0
        %v1729 = vmax.f32 %v1566, 0.0
        %v1730 = vmax.f32 %v1655, 0.0
        %v1731 = vmax.f32 %v1568, 0.0
        %v1732 = vmax.f32 %v1657, 0.0
        %v1733 = vmax.f32 %v1571, 0.0
        %v1734 = vmax.f32 %v1660, 0.0
        %v1735 = vmax.f32 %v1573, 0.0
        %v1736 = vmax.f32 %v1662, 0.0
        %v1737 = vmax.f32 %v1576, 0.0
        %v1738 = vmax.f32 %v1665, 0.0
        %v1739 = vmax.f32 %v1578, 0.0
        %v1740 = vmax.f32 %v1667, 0.0
        %v1741 = vmax.f32 %v1581, 0.0
        %v1742 = vmax.f32 %v1670, 0.0
        %v1743 = vmax.f32 %v1583, 0.0
        %v1744 = vmax.f32 %v1672, 0.0
        %v1745 = vmax.f32 %v1586, 0.0
        %v1746 = vmax.f32 %v1675, 0.0
        %v1747 = vmax.f32 %v1588, 0.0
        %v1748 = vmax.f32 %v1677, 0.0
        %v1749 = vmax.f32 %v1591, 0.0
        %v1750 = vmax.f32 %v1680, 0.0
        %v1751 = vmax.f32 %v1593, 0.0
        %v1752 = vmax.f32 %v1682, 0.0
        %v1753 = vmax.f32 %v1596, 0.0
        %v1754 = vmax.f32 %v1685, 0.0
        %v1755 = vmax.f32 %v1598, 0.0
        %v1756 = vmax.f32 %v1687, 0.0
        %v1757 = vmax.f32 %v1601, 0.0
        %v1758 = vmax.f32 %v1690, 0.0
        %v1759 = vmax.f32 %v1603, 0.0
        %v1760 = vmax.f32 %v1692, 0.0
        %v1761 = vmax.f32 %v1606, 0.0
        %v1762 = vmax.f32 %v1695, 0.0
        %v1763 = vmax.f32 %v1608, 0.0
        %v1764 = vmax.f32 %v1697, 0.0
        %v1765 = vmax.f32 %v1611, 0.0
        %v1766 = vmax.f32 %v1700, 0.0
        %v1767 = vmax.f32 %v1613, 0.0
        %v1768 = vmax.f32 %v1702, 0.0
        %v1769 = vmax.f32 %v1616, 0.0
        %v1770 = vmax.f32 %v1705, 0.0
        %v1771 = vmax.f32 %v1618, 0.0
        %v1772 = vmax.f32 %v1707, 0.0
        %v1773 = vld [vmem:[%s507] sm:$0xff]
        %v1774 = vld [vmem:[%s507 + $0x8] sm:$0xff]
        %v1775 = vld [vmem:[%s507 + $0x10] sm:$0xff]
        %v1776 = vld [vmem:[%s507 + $0x18] sm:$0xff]
        %v1777 = vld [vmem:[%s507 + $0x20] sm:$0xff]
        %v1778 = vld [vmem:[%s507 + $0x28] sm:$0xff]
        %v1779 = vld [vmem:[%s507 + $0x30] sm:$0xff]
        %v1780 = vld [vmem:[%s507 + $0x38] sm:$0xff]
        %v1781 = vld [vmem:[%s507 + $0x40] sm:$0xff]
        %v1782 = vld [vmem:[%s507 + $0x48] sm:$0xff]
        %v1783 = vld [vmem:[%s507 + $0x50] sm:$0xff]
        %v1784 = vld [vmem:[%s507 + $0x58] sm:$0xff]
        %v1785 = vld [vmem:[%s507 + $0x60] sm:$0xff]
        %v1786 = vld [vmem:[%s507 + $0x68] sm:$0xff]
        %v1787 = vld [vmem:[%s507 + $0x70] sm:$0xff]
        %v1788 = vld [vmem:[%s507 + $0x78] sm:$0xff]
        %v1789 = vld [vmem:[%s507 + $0x80] sm:$0xff]
        %v1790 = vld [vmem:[%s507 + $0x88] sm:$0xff]
        %v1791 = vld [vmem:[%s507 + $0x90] sm:$0xff]
        %v1792 = vld [vmem:[%s507 + $0x98] sm:$0xff]
        %v1793 = vld [vmem:[%s507 + $0xa0] sm:$0xff]
        %v1794 = vld [vmem:[%s507 + $0xa8] sm:$0xff]
        %v1795 = vld [vmem:[%s507 + $0xb0] sm:$0xff]
        %v1796 = vld [vmem:[%s507 + $0xb8] sm:$0xff]
        %v1797 = vld [vmem:[%s507 + $0xc0] sm:$0xff]
        %v1798 = vld [vmem:[%s507 + $0xc8] sm:$0xff]
        %v1799 = vld [vmem:[%s507 + $0xd0] sm:$0xff]
        %v1800 = vld [vmem:[%s507 + $0xd8] sm:$0xff]
        %v1801 = vld [vmem:[%s507 + $0xe0] sm:$0xff]
        %v1802 = vld [vmem:[%s507 + $0xe8] sm:$0xff]
        %v1803 = vld [vmem:[%s507 + $0xf0] sm:$0xff]
        %v1804 = vld [vmem:[%s507 + $0xf8] sm:$0xff]
        %v1805 = vld [vmem:[%s501] sm:$0xff]
        %v1806 = vld [vmem:[%s501 + $0x8] sm:$0xff]
        %v1807 = vld [vmem:[%s501 + $0x10] sm:$0xff]
        %v1808 = vld [vmem:[%s501 + $0x18] sm:$0xff]
        %v1809 = vld [vmem:[%s501 + $0x20] sm:$0xff]
        %v1810 = vld [vmem:[%s501 + $0x28] sm:$0xff]
        %v1811 = vld [vmem:[%s501 + $0x30] sm:$0xff]
        %v1812 = vld [vmem:[%s501 + $0x38] sm:$0xff]
        %v1813 = vld [vmem:[%s501 + $0x40] sm:$0xff]
        %v1814 = vld [vmem:[%s501 + $0x48] sm:$0xff]
        %v1815 = vld [vmem:[%s501 + $0x50] sm:$0xff]
        %v1816 = vld [vmem:[%s501 + $0x58] sm:$0xff]
        %v1817 = vld [vmem:[%s501 + $0x60] sm:$0xff]
        %v1818 = vld [vmem:[%s501 + $0x68] sm:$0xff]
        %v1819 = vld [vmem:[%s501 + $0x70] sm:$0xff]
        %v1820 = vld [vmem:[%s501 + $0x78] sm:$0xff]
        %v1821 = vld [vmem:[%s501 + $0x80] sm:$0xff]
        %v1822 = vld [vmem:[%s501 + $0x88] sm:$0xff]
        %v1823 = vld [vmem:[%s501 + $0x90] sm:$0xff]
        %v1824 = vld [vmem:[%s501 + $0x98] sm:$0xff]
        %v1825 = vld [vmem:[%s501 + $0xa0] sm:$0xff]
        %v1826 = vld [vmem:[%s501 + $0xa8] sm:$0xff]
        %v1827 = vld [vmem:[%s501 + $0xb0] sm:$0xff]
        %v1828 = vld [vmem:[%s501 + $0xb8] sm:$0xff]
        %v1829 = vld [vmem:[%s501 + $0xc0] sm:$0xff]
        %v1830 = vld [vmem:[%s501 + $0xc8] sm:$0xff]
        %v1831 = vld [vmem:[%s501 + $0xd0] sm:$0xff]
        %v1832 = vld [vmem:[%s501 + $0xd8] sm:$0xff]
        %v1833 = vld [vmem:[%s501 + $0xe0] sm:$0xff]
        %v1834 = vld [vmem:[%s501 + $0xe8] sm:$0xff]
        %v1835 = vld [vmem:[%s501 + $0xf0] sm:$0xff]
        %v1836 = vld [vmem:[%s501 + $0xf8] sm:$0xff]
        %1837 = vmatpush.msra.mxu0 %v1820
        %1838 = vmatpush.msra.mxu0 %v1819
        %1839 = vmatpush.msra.mxu0 %v1818
        %1840 = vmatpush.msra.mxu0 %v1817
        %1841 = vmatpush.msra.mxu0 %v1816
        %1842 = vmatpush.msra.mxu0 %v1815
        %1843 = vmatpush.msra.mxu0 %v1814
        %1844 = vmatpush.msra.mxu0 %v1813
        %1845 = vmatpush.msra.mxu0 %v1812
        %1846 = vmatpush.msra.mxu0 %v1811
        %1847 = vmatpush.msra.mxu0 %v1810
        %1848 = vmatpush.msra.mxu0 %v1809
        %1849 = vmatpush.msra.mxu0 %v1808
        %1850 = vmatpush.msra.mxu0 %v1807
        %1851 = vmatpush.msra.mxu0 %v1806
        %1852 = vmatpush.msra.mxu0 %v1805
        %1853 = vmatmul.f32.gmra.mxu0 %v1709
        %v1854 = vpop.f32.mrf.mxu0
        %v1855 = vadd.f32 0.0, %v1854
        %1856 = vmatmul.f32.gmra.mxu0 %v1711
        %v1857 = vpop.f32.mrf.mxu0
        %v1858 = vadd.f32 0.0, %v1857
        %1859 = vmatmul.f32.gmra.mxu0 %v1713
        %v1860 = vpop.f32.mrf.mxu0
        %v1861 = vadd.f32 0.0, %v1860
        %1862 = vmatmul.f32.gmra.mxu0 %v1715
        %v1863 = vpop.f32.mrf.mxu0
        %v1864 = vadd.f32 0.0, %v1863
        %1865 = vmatmul.f32.gmra.mxu0 %v1717
        %v1866 = vpop.f32.mrf.mxu0
        %v1867 = vadd.f32 0.0, %v1866
        %1868 = vmatmul.f32.gmra.mxu0 %v1719
        %v1869 = vpop.f32.mrf.mxu0
        %v1870 = vadd.f32 0.0, %v1869
        %1871 = vmatmul.f32.gmra.mxu0 %v1721
        %v1872 = vpop.f32.mrf.mxu0
        %v1873 = vadd.f32 0.0, %v1872
        %1874 = vmatmul.f32.gmra.mxu0 %v1723
        %v1875 = vpop.f32.mrf.mxu0
        %v1876 = vadd.f32 0.0, %v1875
        %1877 = vmatmul.f32.gmra.mxu0 %v1725
        %v1878 = vpop.f32.mrf.mxu0
        %v1879 = vadd.f32 0.0, %v1878
        %1880 = vmatmul.f32.gmra.mxu0 %v1727
        %v1881 = vpop.f32.mrf.mxu0
        %v1882 = vadd.f32 0.0, %v1881
        %1883 = vmatmul.f32.gmra.mxu0 %v1729
        %v1884 = vpop.f32.mrf.mxu0
        %v1885 = vadd.f32 0.0, %v1884
        %1886 = vmatmul.f32.gmra.mxu0 %v1731
        %v1887 = vpop.f32.mrf.mxu0
        %v1888 = vadd.f32 0.0, %v1887
        %1889 = vmatmul.f32.gmra.mxu0 %v1733
        %v1890 = vpop.f32.mrf.mxu0
        %v1891 = vadd.f32 0.0, %v1890
        %1892 = vmatmul.f32.gmra.mxu0 %v1735
        %v1893 = vpop.f32.mrf.mxu0
        %v1894 = vadd.f32 0.0, %v1893
        %1895 = vmatmul.f32.gmra.mxu0 %v1737
        %v1896 = vpop.f32.mrf.mxu0
        %v1897 = vadd.f32 0.0, %v1896
        %1898 = vmatmul.f32.gmra.mxu0 %v1739
        %v1899 = vpop.f32.mrf.mxu0
        %v1900 = vadd.f32 0.0, %v1899
        %1901 = vmatmul.f32.gmra.mxu0 %v1741
        %v1902 = vpop.f32.mrf.mxu0
        %v1903 = vadd.f32 0.0, %v1902
        %1904 = vmatmul.f32.gmra.mxu0 %v1743
        %v1905 = vpop.f32.mrf.mxu0
        %v1906 = vadd.f32 0.0, %v1905
        %1907 = vmatmul.f32.gmra.mxu0 %v1745
        %v1908 = vpop.f32.mrf.mxu0
        %v1909 = vadd.f32 0.0, %v1908
        %1910 = vmatmul.f32.gmra.mxu0 %v1747
        %v1911 = vpop.f32.mrf.mxu0
        %v1912 = vadd.f32 0.0, %v1911
        %1913 = vmatmul.f32.gmra.mxu0 %v1749
        %v1914 = vpop.f32.mrf.mxu0
        %v1915 = vadd.f32 0.0, %v1914
        %1916 = vmatmul.f32.gmra.mxu0 %v1751
        %v1917 = vpop.f32.mrf.mxu0
        %v1918 = vadd.f32 0.0, %v1917
        %1919 = vmatmul.f32.gmra.mxu0 %v1753
        %v1920 = vpop.f32.mrf.mxu0
        %v1921 = vadd.f32 0.0, %v1920
        %1922 = vmatmul.f32.gmra.mxu0 %v1755
        %v1923 = vpop.f32.mrf.mxu0
        %v1924 = vadd.f32 0.0, %v1923
        %1925 = vmatmul.f32.gmra.mxu0 %v1757
        %v1926 = vpop.f32.mrf.mxu0
        %v1927 = vadd.f32 0.0, %v1926
        %1928 = vmatmul.f32.gmra.mxu0 %v1759
        %v1929 = vpop.f32.mrf.mxu0
        %v1930 = vadd.f32 0.0, %v1929
        %1931 = vmatmul.f32.gmra.mxu0 %v1761
        %v1932 = vpop.f32.mrf.mxu0
        %v1933 = vadd.f32 0.0, %v1932
        %1934 = vmatmul.f32.gmra.mxu0 %v1763
        %v1935 = vpop.f32.mrf.mxu0
        %v1936 = vadd.f32 0.0, %v1935
        %1937 = vmatmul.f32.gmra.mxu0 %v1765
        %v1938 = vpop.f32.mrf.mxu0
        %v1939 = vadd.f32 0.0, %v1938
        %1940 = vmatmul.f32.gmra.mxu0 %v1767
        %v1941 = vpop.f32.mrf.mxu0
        %v1942 = vadd.f32 0.0, %v1941
        %1943 = vmatmul.f32.gmra.mxu0 %v1769
        %v1944 = vpop.f32.mrf.mxu0
        %v1945 = vadd.f32 0.0, %v1944
        %1946 = vmatmul.f32.gmra.mxu0 %v1771
        %v1947 = vpop.f32.mrf.mxu0
        %v1948 = vadd.f32 0.0, %v1947
        %1949 = vdwg.mxu0
        %1950 = vmatpush.msra.mxu0 %v1836
        %1951 = vmatpush.msra.mxu0 %v1835
        %1952 = vmatpush.msra.mxu0 %v1834
        %1953 = vmatpush.msra.mxu0 %v1833
        %1954 = vmatpush.msra.mxu0 %v1832
        %1955 = vmatpush.msra.mxu0 %v1831
        %1956 = vmatpush.msra.mxu0 %v1830
        %1957 = vmatpush.msra.mxu0 %v1829
        %1958 = vmatpush.msra.mxu0 %v1828
        %1959 = vmatpush.msra.mxu0 %v1827
        %1960 = vmatpush.msra.mxu0 %v1826
        %1961 = vmatpush.msra.mxu0 %v1825
        %1962 = vmatpush.msra.mxu0 %v1824
        %1963 = vmatpush.msra.mxu0 %v1823
        %1964 = vmatpush.msra.mxu0 %v1822
        %1965 = vmatpush.msra.mxu0 %v1821
        %1966 = vmatmul.f32.gmra.mxu0 %v1710
        %v1967 = vpop.f32.mrf.mxu0
        %v1968 = vadd.f32 %v1855, %v1967
        %1969 = vmatmul.f32.gmra.mxu0 %v1712
        %v1970 = vpop.f32.mrf.mxu0
        %v1971 = vadd.f32 %v1858, %v1970
        %1972 = vmatmul.f32.gmra.mxu0 %v1714
        %v1973 = vpop.f32.mrf.mxu0
        %v1974 = vadd.f32 %v1861, %v1973
        %1975 = vmatmul.f32.gmra.mxu0 %v1716
        %v1976 = vpop.f32.mrf.mxu0
        %v1977 = vadd.f32 %v1864, %v1976
        %1978 = vmatmul.f32.gmra.mxu0 %v1718
        %v1979 = vpop.f32.mrf.mxu0
        %v1980 = vadd.f32 %v1867, %v1979
        %1981 = vmatmul.f32.gmra.mxu0 %v1720
        %v1982 = vpop.f32.mrf.mxu0
        %v1983 = vadd.f32 %v1870, %v1982
        %1984 = vmatmul.f32.gmra.mxu0 %v1722
        %v1985 = vpop.f32.mrf.mxu0
        %v1986 = vadd.f32 %v1873, %v1985
        %1987 = vmatmul.f32.gmra.mxu0 %v1724
        %v1988 = vpop.f32.mrf.mxu0
        %v1989 = vadd.f32 %v1876, %v1988
        %1990 = vmatmul.f32.gmra.mxu0 %v1726
        %v1991 = vpop.f32.mrf.mxu0
        %v1992 = vadd.f32 %v1879, %v1991
        %1993 = vmatmul.f32.gmra.mxu0 %v1728
        %v1994 = vpop.f32.mrf.mxu0
        %v1995 = vadd.f32 %v1882, %v1994
        %1996 = vmatmul.f32.gmra.mxu0 %v1730
        %v1997 = vpop.f32.mrf.mxu0
        %v1998 = vadd.f32 %v1885, %v1997
        %1999 = vmatmul.f32.gmra.mxu0 %v1732
        %v2000 = vpop.f32.mrf.mxu0
        %v2001 = vadd.f32 %v1888, %v2000
        %2002 = vmatmul.f32.gmra.mxu0 %v1734
        %v2003 = vpop.f32.mrf.mxu0
        %v2004 = vadd.f32 %v1891, %v2003
        %2005 = vmatmul.f32.gmra.mxu0 %v1736
        %v2006 = vpop.f32.mrf.mxu0
        %v2007 = vadd.f32 %v1894, %v2006
        %2008 = vmatmul.f32.gmra.mxu0 %v1738
        %v2009 = vpop.f32.mrf.mxu0
        %v2010 = vadd.f32 %v1897, %v2009
        %2011 = vmatmul.f32.gmra.mxu0 %v1740
        %v2012 = vpop.f32.mrf.mxu0
        %v2013 = vadd.f32 %v1900, %v2012
        %2014 = vmatmul.f32.gmra.mxu0 %v1742
        %v2015 = vpop.f32.mrf.mxu0
        %v2016 = vadd.f32 %v1903, %v2015
        %2017 = vmatmul.f32.gmra.mxu0 %v1744
        %v2018 = vpop.f32.mrf.mxu0
        %v2019 = vadd.f32 %v1906, %v2018
        %2020 = vmatmul.f32.gmra.mxu0 %v1746
        %v2021 = vpop.f32.mrf.mxu0
        %v2022 = vadd.f32 %v1909, %v2021
        %2023 = vmatmul.f32.gmra.mxu0 %v1748
        %v2024 = vpop.f32.mrf.mxu0
        %v2025 = vadd.f32 %v1912, %v2024
        %2026 = vmatmul.f32.gmra.mxu0 %v1750
        %v2027 = vpop.f32.mrf.mxu0
        %v2028 = vadd.f32 %v1915, %v2027
        %2029 = vmatmul.f32.gmra.mxu0 %v1752
        %v2030 = vpop.f32.mrf.mxu0
        %v2031 = vadd.f32 %v1918, %v2030
        %2032 = vmatmul.f32.gmra.mxu0 %v1754
        %v2033 = vpop.f32.mrf.mxu0
        %v2034 = vadd.f32 %v1921, %v2033
        %2035 = vmatmul.f32.gmra.mxu0 %v1756
        %v2036 = vpop.f32.mrf.mxu0
        %v2037 = vadd.f32 %v1924, %v2036
        %2038 = vmatmul.f32.gmra.mxu0 %v1758
        %v2039 = vpop.f32.mrf.mxu0
        %v2040 = vadd.f32 %v1927, %v2039
        %2041 = vmatmul.f32.gmra.mxu0 %v1760
        %v2042 = vpop.f32.mrf.mxu0
        %v2043 = vadd.f32 %v1930, %v2042
        %2044 = vmatmul.f32.gmra.mxu0 %v1762
        %v2045 = vpop.f32.mrf.mxu0
        %v2046 = vadd.f32 %v1933, %v2045
        %2047 = vmatmul.f32.gmra.mxu0 %v1764
        %v2048 = vpop.f32.mrf.mxu0
        %v2049 = vadd.f32 %v1936, %v2048
        %2050 = vmatmul.f32.gmra.mxu0 %v1766
        %v2051 = vpop.f32.mrf.mxu0
        %v2052 = vadd.f32 %v1939, %v2051
        %2053 = vmatmul.f32.gmra.mxu0 %v1768
        %v2054 = vpop.f32.mrf.mxu0
        %v2055 = vadd.f32 %v1942, %v2054
        %2056 = vmatmul.f32.gmra.mxu0 %v1770
        %v2057 = vpop.f32.mrf.mxu0
        %v2058 = vadd.f32 %v1945, %v2057
        %2059 = vmatmul.f32.gmra.mxu0 %v1772
        %v2060 = vpop.f32.mrf.mxu0
        %v2061 = vadd.f32 %v1948, %v2060
        %2062 = vdwg.mxu0
        %v2063 = vadd.f32 %v1773, %v1968
        %v2064 = vadd.f32 %v1774, %v1971
        %v2065 = vadd.f32 %v1775, %v1974
        %v2066 = vadd.f32 %v1776, %v1977
        %v2067 = vadd.f32 %v1777, %v1980
        %v2068 = vadd.f32 %v1778, %v1983
        %v2069 = vadd.f32 %v1779, %v1986
        %v2070 = vadd.f32 %v1780, %v1989
        %v2071 = vadd.f32 %v1781, %v1992
        %v2072 = vadd.f32 %v1782, %v1995
        %v2073 = vadd.f32 %v1783, %v1998
        %v2074 = vadd.f32 %v1784, %v2001
        %v2075 = vadd.f32 %v1785, %v2004
        %v2076 = vadd.f32 %v1786, %v2007
        %v2077 = vadd.f32 %v1787, %v2010
        %v2078 = vadd.f32 %v1788, %v2013
        %v2079 = vadd.f32 %v1789, %v2016
        %v2080 = vadd.f32 %v1790, %v2019
        %v2081 = vadd.f32 %v1791, %v2022
        %v2082 = vadd.f32 %v1792, %v2025
        %v2083 = vadd.f32 %v1793, %v2028
        %v2084 = vadd.f32 %v1794, %v2031
        %v2085 = vadd.f32 %v1795, %v2034
        %v2086 = vadd.f32 %v1796, %v2037
        %v2087 = vadd.f32 %v1797, %v2040
        %v2088 = vadd.f32 %v1798, %v2043
        %v2089 = vadd.f32 %v1799, %v2046
        %v2090 = vadd.f32 %v1800, %v2049
        %v2091 = vadd.f32 %v1801, %v2052
        %v2092 = vadd.f32 %v1802, %v2055
        %v2093 = vadd.f32 %v1803, %v2058
        %v2094 = vadd.f32 %v1804, %v2061
        %vm2095 = vcmask 261120
        %2096 = vst.msk [vmem:[%s507] sm:$0xff] %vm2095, %v2063
        %2097 = vst.msk [vmem:[%s507 + $0x8] sm:$0xff] %vm2095, %v2064
        %2098 = vst.msk [vmem:[%s507 + $0x10] sm:$0xff] %vm2095, %v2065
        %2099 = vst.msk [vmem:[%s507 + $0x18] sm:$0xff] %vm2095, %v2066
        %2100 = vst.msk [vmem:[%s507 + $0x20] sm:$0xff] %vm2095, %v2067
        %2101 = vst.msk [vmem:[%s507 + $0x28] sm:$0xff] %vm2095, %v2068
        %2102 = vst.msk [vmem:[%s507 + $0x30] sm:$0xff] %vm2095, %v2069
        %2103 = vst.msk [vmem:[%s507 + $0x38] sm:$0xff] %vm2095, %v2070
        %2104 = vst.msk [vmem:[%s507 + $0x40] sm:$0xff] %vm2095, %v2071
        %2105 = vst.msk [vmem:[%s507 + $0x48] sm:$0xff] %vm2095, %v2072
        %2106 = vst.msk [vmem:[%s507 + $0x50] sm:$0xff] %vm2095, %v2073
        %2107 = vst.msk [vmem:[%s507 + $0x58] sm:$0xff] %vm2095, %v2074
        %2108 = vst.msk [vmem:[%s507 + $0x60] sm:$0xff] %vm2095, %v2075
        %2109 = vst.msk [vmem:[%s507 + $0x68] sm:$0xff] %vm2095, %v2076
        %2110 = vst.msk [vmem:[%s507 + $0x70] sm:$0xff] %vm2095, %v2077
        %2111 = vst.msk [vmem:[%s507 + $0x78] sm:$0xff] %vm2095, %v2078
        %2112 = vst.msk [vmem:[%s507 + $0x80] sm:$0xff] %vm2095, %v2079
        %2113 = vst.msk [vmem:[%s507 + $0x88] sm:$0xff] %vm2095, %v2080
        %2114 = vst.msk [vmem:[%s507 + $0x90] sm:$0xff] %vm2095, %v2081
        %2115 = vst.msk [vmem:[%s507 + $0x98] sm:$0xff] %vm2095, %v2082
        %2116 = vst.msk [vmem:[%s507 + $0xa0] sm:$0xff] %vm2095, %v2083
        %2117 = vst.msk [vmem:[%s507 + $0xa8] sm:$0xff] %vm2095, %v2084
        %2118 = vst.msk [vmem:[%s507 + $0xb0] sm:$0xff] %vm2095, %v2085
        %2119 = vst.msk [vmem:[%s507 + $0xb8] sm:$0xff] %vm2095, %v2086
        %2120 = vst.msk [vmem:[%s507 + $0xc0] sm:$0xff] %vm2095, %v2087
        %2121 = vst.msk [vmem:[%s507 + $0xc8] sm:$0xff] %vm2095, %v2088
        %2122 = vst.msk [vmem:[%s507 + $0xd0] sm:$0xff] %vm2095, %v2089
        %2123 = vst.msk [vmem:[%s507 + $0xd8] sm:$0xff] %vm2095, %v2090
        %2124 = vst.msk [vmem:[%s507 + $0xe0] sm:$0xff] %vm2095, %v2091
        %2125 = vst.msk [vmem:[%s507 + $0xe8] sm:$0xff] %vm2095, %v2092
        %2126 = vst.msk [vmem:[%s507 + $0xf0] sm:$0xff] %vm2095, %v2093
        %2127 = vst.msk [vmem:[%s507 + $0xf8] sm:$0xff] %vm2095, %v2094
        %p2128 = scmp.eq.s32.totalorder %s25, 1
        // Predicated region
        $region99: #{tpu_custom_call.1} parent=89 // pred_check
          %p2129 = pneg %p2128
        $region100: #{tpu_custom_call.1} parent=89 // pred_check_branch
          %2131 = sbr.rel (%p2129) target = $region102
        $region101: #{tpu_custom_call.1} parent=89 // pred_region
          %v2132 = vld [vmem:[%s507] sm:$0xff]
          %v2133 = vld [vmem:[%s507 + $0x8] sm:$0xff]
          %v2134 = vld [vmem:[%s507 + $0x10] sm:$0xff]
          %v2135 = vld [vmem:[%s507 + $0x18] sm:$0xff]
          %v2136 = vld [vmem:[%s507 + $0x20] sm:$0xff]
          %v2137 = vld [vmem:[%s507 + $0x28] sm:$0xff]
          %v2138 = vld [vmem:[%s507 + $0x30] sm:$0xff]
          %v2139 = vld [vmem:[%s507 + $0x38] sm:$0xff]
          %v2140 = vld [vmem:[%s507 + $0x40] sm:$0xff]
          %v2141 = vld [vmem:[%s507 + $0x48] sm:$0xff]
          %v2142 = vld [vmem:[%s507 + $0x50] sm:$0xff]
          %v2143 = vld [vmem:[%s507 + $0x58] sm:$0xff]
          %v2144 = vld [vmem:[%s507 + $0x60] sm:$0xff]
          %v2145 = vld [vmem:[%s507 + $0x68] sm:$0xff]
          %v2146 = vld [vmem:[%s507 + $0x70] sm:$0xff]
          %v2147 = vld [vmem:[%s507 + $0x78] sm:$0xff]
          %v2148 = vld [vmem:[%s507 + $0x80] sm:$0xff]
          %v2149 = vld [vmem:[%s507 + $0x88] sm:$0xff]
          %v2150 = vld [vmem:[%s507 + $0x90] sm:$0xff]
          %v2151 = vld [vmem:[%s507 + $0x98] sm:$0xff]
          %v2152 = vld [vmem:[%s507 + $0xa0] sm:$0xff]
          %v2153 = vld [vmem:[%s507 + $0xa8] sm:$0xff]
          %v2154 = vld [vmem:[%s507 + $0xb0] sm:$0xff]
          %v2155 = vld [vmem:[%s507 + $0xb8] sm:$0xff]
          %v2156 = vld [vmem:[%s507 + $0xc0] sm:$0xff]
          %v2157 = vld [vmem:[%s507 + $0xc8] sm:$0xff]
          %v2158 = vld [vmem:[%s507 + $0xd0] sm:$0xff]
          %v2159 = vld [vmem:[%s507 + $0xd8] sm:$0xff]
          %v2160 = vld [vmem:[%s507 + $0xe0] sm:$0xff]
          %v2161 = vld [vmem:[%s507 + $0xe8] sm:$0xff]
          %v2162 = vld [vmem:[%s507 + $0xf0] sm:$0xff]
          %v2163 = vld [vmem:[%s507 + $0xf8] sm:$0xff]
          %v2164 = vld [vmem:[%s8] sm:$0x1]
          %v2166 = vperm.slane %v2164, 0
          %v2168 = vadd.f32 %v2132, %v2166
          %v2169 = vadd.f32 %v2133, %v2166
          %v2170 = vadd.f32 %v2134, %v2166
          %v2171 = vadd.f32 %v2135, %v2166
          %v2172 = vadd.f32 %v2136, %v2166
          %v2173 = vadd.f32 %v2137, %v2166
          %v2174 = vadd.f32 %v2138, %v2166
          %v2175 = vadd.f32 %v2139, %v2166
          %v2176 = vadd.f32 %v2140, %v2166
          %v2177 = vadd.f32 %v2141, %v2166
          %v2178 = vadd.f32 %v2142, %v2166
          %v2179 = vadd.f32 %v2143, %v2166
          %v2180 = vadd.f32 %v2144, %v2166
          %v2181 = vadd.f32 %v2145, %v2166
          %v2182 = vadd.f32 %v2146, %v2166
          %v2183 = vadd.f32 %v2147, %v2166
          %v2184 = vadd.f32 %v2148, %v2166
          %v2185 = vadd.f32 %v2149, %v2166
          %v2186 = vadd.f32 %v2150, %v2166
          %v2187 = vadd.f32 %v2151, %v2166
          %v2188 = vadd.f32 %v2152, %v2166
          %v2189 = vadd.f32 %v2153, %v2166
          %v2190 = vadd.f32 %v2154, %v2166
          %v2191 = vadd.f32 %v2155, %v2166
          %v2192 = vadd.f32 %v2156, %v2166
          %v2193 = vadd.f32 %v2157, %v2166
          %v2194 = vadd.f32 %v2158, %v2166
          %v2195 = vadd.f32 %v2159, %v2166
          %v2196 = vadd.f32 %v2160, %v2166
          %v2197 = vadd.f32 %v2161, %v2166
          %v2198 = vadd.f32 %v2162, %v2166
          %v2199 = vadd.f32 %v2163, %v2166
          %v2200 = vmax.f32 %v2168, 0.0
          %v2201 = vmax.f32 %v2169, 0.0
          %v2202 = vmax.f32 %v2170, 0.0
          %v2203 = vmax.f32 %v2171, 0.0
          %v2204 = vmax.f32 %v2172, 0.0
          %v2205 = vmax.f32 %v2173, 0.0
          %v2206 = vmax.f32 %v2174, 0.0
          %v2207 = vmax.f32 %v2175, 0.0
          %v2208 = vmax.f32 %v2176, 0.0
          %v2209 = vmax.f32 %v2177, 0.0
          %v2210 = vmax.f32 %v2178, 0.0
          %v2211 = vmax.f32 %v2179, 0.0
          %v2212 = vmax.f32 %v2180, 0.0
          %v2213 = vmax.f32 %v2181, 0.0
          %v2214 = vmax.f32 %v2182, 0.0
          %v2215 = vmax.f32 %v2183, 0.0
          %v2216 = vmax.f32 %v2184, 0.0
          %v2217 = vmax.f32 %v2185, 0.0
          %v2218 = vmax.f32 %v2186, 0.0
          %v2219 = vmax.f32 %v2187, 0.0
          %v2220 = vmax.f32 %v2188, 0.0
          %v2221 = vmax.f32 %v2189, 0.0
          %v2222 = vmax.f32 %v2190, 0.0
          %v2223 = vmax.f32 %v2191, 0.0
          %v2224 = vmax.f32 %v2192, 0.0
          %v2225 = vmax.f32 %v2193, 0.0
          %v2226 = vmax.f32 %v2194, 0.0
          %v2227 = vmax.f32 %v2195, 0.0
          %v2228 = vmax.f32 %v2196, 0.0
          %v2229 = vmax.f32 %v2197, 0.0
          %v2230 = vmax.f32 %v2198, 0.0
          %v2231 = vmax.f32 %v2199, 0.0
          %2232 = vst.msk [vmem:[%s507] sm:$0xff] %vm2095, %v2200
          %2233 = vst.msk [vmem:[%s507 + $0x8] sm:$0xff] %vm2095, %v2201
          %2234 = vst.msk [vmem:[%s507 + $0x10] sm:$0xff] %vm2095, %v2202
          %2235 = vst.msk [vmem:[%s507 + $0x18] sm:$0xff] %vm2095, %v2203
          %2236 = vst.msk [vmem:[%s507 + $0x20] sm:$0xff] %vm2095, %v2204
          %2237 = vst.msk [vmem:[%s507 + $0x28] sm:$0xff] %vm2095, %v2205
          %2238 = vst.msk [vmem:[%s507 + $0x30] sm:$0xff] %vm2095, %v2206
          %2239 = vst.msk [vmem:[%s507 + $0x38] sm:$0xff] %vm2095, %v2207
          %2240 = vst.msk [vmem:[%s507 + $0x40] sm:$0xff] %vm2095, %v2208
          %2241 = vst.msk [vmem:[%s507 + $0x48] sm:$0xff] %vm2095, %v2209
          %2242 = vst.msk [vmem:[%s507 + $0x50] sm:$0xff] %vm2095, %v2210
          %2243 = vst.msk [vmem:[%s507 + $0x58] sm:$0xff] %vm2095, %v2211
          %2244 = vst.msk [vmem:[%s507 + $0x60] sm:$0xff] %vm2095, %v2212
          %2245 = vst.msk [vmem:[%s507 + $0x68] sm:$0xff] %vm2095, %v2213
          %2246 = vst.msk [vmem:[%s507 + $0x70] sm:$0xff] %vm2095, %v2214
          %2247 = vst.msk [vmem:[%s507 + $0x78] sm:$0xff] %vm2095, %v2215
          %2248 = vst.msk [vmem:[%s507 + $0x80] sm:$0xff] %vm2095, %v2216
          %2249 = vst.msk [vmem:[%s507 + $0x88] sm:$0xff] %vm2095, %v2217
          %2250 = vst.msk [vmem:[%s507 + $0x90] sm:$0xff] %vm2095, %v2218
          %2251 = vst.msk [vmem:[%s507 + $0x98] sm:$0xff] %vm2095, %v2219
          %2252 = vst.msk [vmem:[%s507 + $0xa0] sm:$0xff] %vm2095, %v2220
          %2253 = vst.msk [vmem:[%s507 + $0xa8] sm:$0xff] %vm2095, %v2221
          %2254 = vst.msk [vmem:[%s507 + $0xb0] sm:$0xff] %vm2095, %v2222
          %2255 = vst.msk [vmem:[%s507 + $0xb8] sm:$0xff] %vm2095, %v2223
          %2256 = vst.msk [vmem:[%s507 + $0xc0] sm:$0xff] %vm2095, %v2224
          %2257 = vst.msk [vmem:[%s507 + $0xc8] sm:$0xff] %vm2095, %v2225
          %2258 = vst.msk [vmem:[%s507 + $0xd0] sm:$0xff] %vm2095, %v2226
          %2259 = vst.msk [vmem:[%s507 + $0xd8] sm:$0xff] %vm2095, %v2227
          %2260 = vst.msk [vmem:[%s507 + $0xe0] sm:$0xff] %vm2095, %v2228
          %2261 = vst.msk [vmem:[%s507 + $0xe8] sm:$0xff] %vm2095, %v2229
          %2262 = vst.msk [vmem:[%s507 + $0xf0] sm:$0xff] %vm2095, %v2230
          %2263 = vst.msk [vmem:[%s507 + $0xf8] sm:$0xff] %vm2095, %v2231
        $region102: #{tpu_custom_call.1} parent=89 // pred_fallthru
          _
        %s2264 = smul.u32 32, %s24
        %p2265 = scmp.lt.s32.totalorder %s2264, 31
        %s2266 = scalar_select %p2265, %s2264, 31
        %s2267 = smul.addr %s2266, 8
        %s2268 = scalar_lea.vmem %s9, %s2267
        // Predicated region
        $region103: #{tpu_custom_call.1} parent=89 // pred_check
          %p2269 = pneg %p259
        $region104: #{tpu_custom_call.1} parent=89 // pred_check_branch
          %2271 = sbr.rel (%p2269) target = $region106
        $region105: #{tpu_custom_call.1} parent=89 // pred_region
          %s2272 = smul.u32 32, %s24
        $region106: #{tpu_custom_call.1} parent=89 // pred_fallthru
          _
        // Predicated region
        $region107: #{tpu_custom_call.1} parent=89 // pred_check
          %p2273 = pneg %p259
        $region108: #{tpu_custom_call.1} parent=89 // pred_check_branch
          %2275 = sbr.rel (%p2273) target = $region110
        $region109: #{tpu_custom_call.1} parent=89 // pred_region
          %s2276 = smul.u32 32, %s24
          %p2277 = scmp.lt.s32.totalorder %s2276, 31
          %s2278 = scalar_select %p2277, %s2276, 31
          %s2279 = smul.addr %s2278, 8
          %s2280 = scalar_lea.vmem %s9, %s2279
        $region110: #{tpu_custom_call.1} parent=89 // pred_fallthru
          _
      $region90: #{tpu_custom_call.1} parent=5 // pred_fallthru
        _
      %p2281 = scmp.le.s32.totalorder 2, %s15
      // Predicated region
      $region111: #{tpu_custom_call.1} parent=5 // pred_check
        %p2282 = pneg %p2281
      $region112: #{tpu_custom_call.1} parent=5 // pred_check_branch
        %2284 = sbr.rel (%p2282) target = $region114
      $region113: #{tpu_custom_call.1} parent=5 // pred_region
        %s2285 = ssub.s32 %s15, 2
      $region114: #{tpu_custom_call.1} parent=5 // pred_fallthru
        _
    $region6: #{tpu_custom_call.1} parent=1 // loop_footer
      %s19 = sadd.s32 1, %s15
    $region7: #{tpu_custom_call.1} parent=1 // loop_footer_branch
      %14 = sbr.rel target = $region3
    $region8: #{tpu_custom_call.1} parent=1 // loop_exit
      _

</llo_original>
